<compile_context>
chip_gen: v6e
topology: v6e:2x2x1
jax: 0.10.0
libtpu: 0.0.40
codegen_flags: <defaults>
</compile_context>

<pallas_src>
import math

import jax
import jax.numpy as jnp
from jax.experimental import pallas as pl
from jax.experimental.pallas import tpu as pltpu

LN_EPS = 1e-5


def _round_up(n, m):
    return ((n + m - 1) // m) * m


def _layernorm(x, gamma, beta):
    # Two-pass (centered) variance, identical to the reference LayerNorm.
    mean = jnp.mean(x, axis=-1, keepdims=True)
    c = x - mean
    var = jnp.mean(c * c, axis=-1, keepdims=True)
    return c * jax.lax.rsqrt(var + LN_EPS) * gamma + beta


def _make_kernel(bt, s, f, fp):
    m = bt * s

    def kernel(x_ref,
               g1_ref, b1_ref,
               wqkv_ref, bqkv_ref,
               g2_ref, b2_ref,
               w1_ref, bb1_ref, w2_ref, bb2_ref,
               o_ref):
        x2 = x_ref[...].astype(jnp.float32)                          # (M, F)

        # ---- sublayer 0: x + SA(LN(x)) ----
        h = _layernorm(x2, g1_ref[...], b1_ref[...]).astype(jnp.bfloat16)
        # Fused QKV projection; q columns are pre-scaled by 1/sqrt(F) at pack time.
        qkv = (jnp.dot(h, wqkv_ref[...], preferred_element_type=jnp.float32)
               + bqkv_ref[...]).astype(jnp.bfloat16)                 # (M, 3*Fp)
        qb = qkv[:, :fp].reshape(bt, s, fp)
        kb = qkv[:, fp:2 * fp].reshape(bt, s, fp)
        vb = qkv[:, 2 * fp:].reshape(bt, s, fp)

        scores = jnp.einsum('bqd,bkd->bqk', qb, kb,
                            preferred_element_type=jnp.float32)      # (Bt, S, S)
        mx = jnp.max(scores, axis=-1, keepdims=True)
        e = jnp.exp(scores - mx)
        denom = jnp.sum(e, axis=-1, keepdims=True)
        # Approx reciprocal runs on the EUP; adds ~1e-3..1e-4 rel err on top of bf16 matmul error.
        prob = (e * pl.reciprocal(denom, approx=True)).astype(jnp.bfloat16)

        sa = jnp.einsum('bqk,bkd->bqd', prob, vb,
                        preferred_element_type=jnp.float32)          # (Bt, S, Fp)
        x1 = x2 + sa.reshape(m, fp)[:, :f]                           # residual on true lanes

        # ---- sublayer 1: x1 + FFN(LN(x1)) ----
        h2 = _layernorm(x1, g2_ref[...], b2_ref[...]).astype(jnp.bfloat16)
        hid = (jnp.dot(h2, w1_ref[...], preferred_element_type=jnp.float32)
               + bb1_ref[...]).astype(jnp.bfloat16)
        hid = jnp.maximum(hid, 0.0)                                  # ReLU (exact in bf16)
        ffn = jnp.dot(hid, w2_ref[...], preferred_element_type=jnp.float32) + bb2_ref[...]

        o_ref[...] = (x1 + ffn).astype(o_ref.dtype)

    return kernel

# TODO(synk): for very long sequences, replace the materialized (S, S) scores with a
# flash-style online-softmax loop over KV tiles (not needed at these shapes).


def _vmem_capacity_bytes():
    try:
        info = pltpu.get_tpu_info()
        cap = getattr(info, "vmem_capacity_bytes", None)
        if cap:
            return int(cap)
    except Exception:
        pass
    return 64 << 20   # conservative default (v7x per-TensorCore VMEM)


def _choose_block_batch(B, S, max_rows, target_rows=256):
    divs = [d for d in range(1, B + 1) if B % d == 0]
    # Block second-to-last dim (Bt*S) must be a multiple of 8 unless it spans the full array.
    ok = [d for d in divs if (d * S) % 8 == 0 or d == B] or [B]
    fits = [d for d in ok if d * S <= max_rows] or [min(ok)]
    # Prefer >= 4 grid steps (pipeline overlap), else >= 2 (megacore), else whatever fits.
    for min_steps in (4, 2, 1):
        cand = [d for d in fits if B // d >= min_steps]
        if cand:
            fits = cand
            break
    big = [d for d in fits if d * S >= target_rows]
    return min(big) if big else max(fits)


def _pack_params(p, Fp, Hp, scale):
    """(in, out) layout, weight output dims zero-padded to lane multiples, bf16 weights.
    Softmax 1/sqrt(F) folded into the Q weights/bias."""
    def pad_cols(a, cols):
        return jnp.pad(a, ((0, 0), (0, cols - a.shape[1])))

    def pad_rows(a, rows):
        return jnp.pad(a, ((0, rows - a.shape[0]), (0, 0)))

    wqkv = jnp.concatenate([
        pad_cols(p['wq'].T * scale, Fp),
        pad_cols(p['wk'].T, Fp),
        pad_cols(p['wv'].T, Fp),
    ], axis=1)                                                        # (F, 3*Fp)
    bqkv = jnp.concatenate([
        pad_cols(p['bq'] * scale, Fp),
        pad_cols(p['bk'], Fp),
        pad_cols(p['bv'], Fp),
    ], axis=1)                                                        # (1, 3*Fp)

    return dict(
        g1=p['g1'], b1=p['b1'],
        wqkv=wqkv.astype(jnp.bfloat16), bqkv=bqkv,
        g2=p['g2'], b2=p['b2'],
        w1=pad_cols(p['w1'].T, Hp).astype(jnp.bfloat16), bb1=pad_cols(p['bb1'], Hp),
        w2=pad_rows(p['w2'].T, Hp).astype(jnp.bfloat16), bb2=p['bb2'],
    )


def geo_encoder_layer(x, params):
    """x: (B, S, F) float32; params: dict of torch-convention weights (see init_params)."""
    B, S, F = x.shape
    H = params['w1'].shape[0]
    Fp = _round_up(F, 128)
    Hp = _round_up(H, 128)

    cap = _vmem_capacity_bytes()
    max_rows = 512 if cap <= (64 << 20) else 1024
    Bt = _choose_block_batch(B, S, max_rows)
    rows = Bt * S

    scale = 1.0 / math.sqrt(float(F))
    kp = _pack_params(params, Fp, Hp, scale)

    x2d = x.astype(jnp.float32).reshape(B * S, F)     # free XLA reshape, no padded copy
    kernel = _make_kernel(Bt, S, F, Fp)

    # Rough VMEM budget (weights + blocks + intermediates) with headroom, capped at 75% of
    # physical VMEM so it is safe on v7x (64 MiB) as well as v5e/v6e (128 MiB).
    bytes_w = 2 * (F * 3 * Fp + F * Hp + Hp * F)                      # bf16 weights
    bytes_b = 4 * (3 * Fp + Hp + 5 * F)                               # f32 biases + LN params

    def vmem_limit(wbuf):
        blk_io = 2 * 2 * rows * F * 4                                 # x in + out, double-buffered
        inter = 4 * rows * (6 * Fp + 2 * Hp + 6 * F) + 4 * 3 * Bt * S * S
        need = blk_io + wbuf * (bytes_w + bytes_b) + inter
        return min(max(int(1.5 * need) + (8 << 20), 32 << 20), int(0.75 * cap))

    def build(single_buffer_weights):
        def const(shape):
            if single_buffer_weights:
                # Index map never changes -> a second buffer is pure VMEM waste.
                return pl.BlockSpec(shape, lambda b: (0, 0), pipeline_mode=pl.Buffered(1))
            return pl.BlockSpec(shape, lambda b: (0, 0))

        in_specs = [
            pl.BlockSpec((rows, F), lambda b: (b, 0)),    # x rows for this grid step
            const((1, F)), const((1, F)),                 # LN1 gamma, beta
            const((F, 3 * Fp)), const((1, 3 * Fp)),       # fused Wqkv (in,out), bqkv
            const((1, F)), const((1, F)),                 # LN2 gamma, beta
            const((F, Hp)), const((1, Hp)),               # W1 (in,out), b1
            const((Hp, F)), const((1, F)),                # W2 (in,out), b2
        ]
        out_spec = pl.BlockSpec((rows, F), lambda b: (b, 0))

        return pl.pallas_call(
            kernel,
            out_shape=jax.ShapeDtypeStruct((B * S, F), jnp.float32),
            grid_spec=pltpu.PrefetchScalarGridSpec(
                num_scalar_prefetch=0,
                grid=(B // Bt,),
                in_specs=in_specs,
                out_specs=out_spec,
            ),
            compiler_params=pltpu.CompilerParams(
                dimension_semantics=("parallel",),
                vmem_limit_bytes=vmem_limit(1 if single_buffer_weights else 2),
            ),
        )

    args = (x2d,
            kp['g1'], kp['b1'],
            kp['wqkv'], kp['bqkv'],
            kp['g2'], kp['b2'],
            kp['w1'], kp['bb1'], kp['w2'], kp['bb2'])
    try:
        out2d = build(True)(*args)
    except Exception:
        # pipeline_mode=pl.Buffered(1) unsupported on this jax/libtpu -> default double-buffering.
        out2d = build(False)(*args)

    return out2d.reshape(B, S, F)


def init_params(key, features, exp_factor):
    F = features
    H = exp_factor * features
    keys = jax.random.split(key, 5)

    def lin(k, out_dim, in_dim):
        kw, kb = jax.random.split(k)
        bound = 1.0 / math.sqrt(in_dim)
        w = jax.random.uniform(kw, (out_dim, in_dim), jnp.float32, -bound, bound)
        b = jax.random.uniform(kb, (1, out_dim), jnp.float32, -bound, bound)
        return w, b

    wq, bq = lin(keys[0], F, F)
    wk, bk = lin(keys[1], F, F)
    wv, bv = lin(keys[2], F, F)
    w1, bb1 = lin(keys[3], H, F)
    w2, bb2 = lin(keys[4], F, H)

    return dict(
        g1=jnp.ones((1, F), jnp.float32), b1=jnp.zeros((1, F), jnp.float32),
        wq=wq, bq=bq, wk=wk, bk=bk, wv=wv, bv=bv,
        g2=jnp.ones((1, F), jnp.float32), b2=jnp.zeros((1, F), jnp.float32),
        w1=w1, bb1=bb1, w2=w2, bb2=bb2,
    )


def _reference(x, p):
    # pure-JAX f32 reference of GeoEncoderLayer.forward (dropout inactive)
    def ln(z, g, b):
        m = jnp.mean(z, -1, keepdims=True)
        v = jnp.mean((z - m) ** 2, -1, keepdims=True)
        return (z - m) * jax.lax.rsqrt(v + LN_EPS) * g + b

    h = ln(x, p["g1"], p["b1"])
    q = h @ p["wq"].T + p["bq"]
    k = h @ p["wk"].T + p["bk"]
    v = h @ p["wv"].T + p["bv"]
    scores = q @ jnp.swapaxes(k, -1, -2) / math.sqrt(x.shape[-1])
    prob = jax.nn.softmax(scores, axis=-1)
    x1 = x + prob @ v
    h2 = ln(x1, p["g2"], p["b2"])
    ffn = jnp.maximum(h2 @ p["w1"].T + p["bb1"], 0.0) @ p["w2"].T + p["bb2"]
    return x1 + ffn


if __name__ == "__main__":
    B, S, F, exp_factor = 2, 8, 32, 4
    key = jax.random.PRNGKey(0)
    kx, kparam = jax.random.split(key)
    x = jax.random.normal(kx, (B, S, F), jnp.float32)
    params = init_params(kparam, F, exp_factor)

    out = geo_encoder_layer(x, params)
    out = jax.block_until_ready(out)

    ref = _reference(x, params)
    assert out.shape == (B, S, F)
    # bf16-fed matmuls (f32 accumulation) + approx softmax reciprocal -> widened tolerance
    rel = float(jnp.linalg.norm(out - ref) / jnp.linalg.norm(ref))
    ok = bool(jnp.allclose(out, ref, atol=1e-1, rtol=1e-1)) and rel < 3e-2
    assert ok, f"mismatch vs reference (rel_fro={rel})"
    print("KERNEL_OK")
</pallas_src>

<mosaic_0001>
module attributes {stable_mosaic.version = 11 : i64} {
  func.func @kernel(%arg0: i32, %arg1: memref<8x32xf32, #tpu.memory_space<vmem>>, %arg2: memref<1x32xf32, #tpu.memory_space<vmem>>, %arg3: memref<1x32xf32, #tpu.memory_space<vmem>>, %arg4: memref<32x384xbf16, #tpu.memory_space<vmem>>, %arg5: memref<1x384xf32, #tpu.memory_space<vmem>>, %arg6: memref<1x32xf32, #tpu.memory_space<vmem>>, %arg7: memref<1x32xf32, #tpu.memory_space<vmem>>, %arg8: memref<32x128xbf16, #tpu.memory_space<vmem>>, %arg9: memref<1x128xf32, #tpu.memory_space<vmem>>, %arg10: memref<128x32xbf16, #tpu.memory_space<vmem>>, %arg11: memref<1x32xf32, #tpu.memory_space<vmem>>, %arg12: memref<8x32xf32, #tpu.memory_space<vmem>>) attributes {dimension_semantics = [#tpu.dimension_semantics<parallel>], iteration_bounds = array<i64: 2>, scalar_prefetch = 0 : i64, scratch_operands = 0 : i64, tpu.core_type = #tpu.core_type<tc>, window_params = [{transform_indices = @transform_0, window_bounds = array<i64: 8, 32>}, {pipeline_mode = #tpu.pipeline_mode<synchronous>, transform_indices = @transform_1, window_bounds = array<i64: 1, 32>}, {pipeline_mode = #tpu.pipeline_mode<synchronous>, transform_indices = @transform_2, window_bounds = array<i64: 1, 32>}, {pipeline_mode = #tpu.pipeline_mode<synchronous>, transform_indices = @transform_3, window_bounds = array<i64: 32, 384>}, {pipeline_mode = #tpu.pipeline_mode<synchronous>, transform_indices = @transform_4, window_bounds = array<i64: 1, 384>}, {pipeline_mode = #tpu.pipeline_mode<synchronous>, transform_indices = @transform_5, window_bounds = array<i64: 1, 32>}, {pipeline_mode = #tpu.pipeline_mode<synchronous>, transform_indices = @transform_6, window_bounds = array<i64: 1, 32>}, {pipeline_mode = #tpu.pipeline_mode<synchronous>, transform_indices = @transform_7, window_bounds = array<i64: 32, 128>}, {pipeline_mode = #tpu.pipeline_mode<synchronous>, transform_indices = @transform_8, window_bounds = array<i64: 1, 128>}, {pipeline_mode = #tpu.pipeline_mode<synchronous>, transform_indices = @transform_9, window_bounds = array<i64: 128, 32>}, {pipeline_mode = #tpu.pipeline_mode<synchronous>, transform_indices = @transform_10, window_bounds = array<i64: 1, 32>}, {transform_indices = @transform_11, window_bounds = array<i64: 8, 32>}]} {
    %c0 = arith.constant 0 : index
    %c0_0 = arith.constant 0 : index
    %0 = vector.load %arg1[%c0, %c0_0] : memref<8x32xf32, #tpu.memory_space<vmem>>, vector<8x32xf32>
    %c0_1 = arith.constant 0 : index
    %c0_2 = arith.constant 0 : index
    %1 = vector.load %arg2[%c0_1, %c0_2] : memref<1x32xf32, #tpu.memory_space<vmem>>, vector<1x32xf32>
    %c0_3 = arith.constant 0 : index
    %c0_4 = arith.constant 0 : index
    %2 = vector.load %arg3[%c0_3, %c0_4] : memref<1x32xf32, #tpu.memory_space<vmem>>, vector<1x32xf32>
    %cst = arith.constant dense<0.000000e+00> : vector<8xf32>
    %3 = vector.multi_reduction <add>, %0, %cst [1] : vector<8x32xf32> to vector<8xf32>
    %4 = vector.shape_cast %3 : vector<8xf32> to vector<8x1xf32>
    %cst_5 = arith.constant 3.200000e+01 : f32
    %5 = vector.broadcast %cst_5 : f32 to vector<8x1xf32>
    %6 = arith.divf %4, %5 : vector<8x1xf32>
    %7 = vector.broadcast %6 : vector<8x1xf32> to vector<8x32xf32>
    %8 = arith.subf %0, %7 : vector<8x32xf32>
    %9 = arith.mulf %8, %8 : vector<8x32xf32>
    %cst_6 = arith.constant dense<0.000000e+00> : vector<8xf32>
    %10 = vector.multi_reduction <add>, %9, %cst_6 [1] : vector<8x32xf32> to vector<8xf32>
    %11 = vector.shape_cast %10 : vector<8xf32> to vector<8x1xf32>
    %cst_7 = arith.constant 3.200000e+01 : f32
    %12 = vector.broadcast %cst_7 : f32 to vector<8x1xf32>
    %13 = arith.divf %11, %12 : vector<8x1xf32>
    %cst_8 = arith.constant 9.99999974E-6 : f32
    %14 = vector.broadcast %cst_8 : f32 to vector<8x1xf32>
    %15 = arith.addf %13, %14 : vector<8x1xf32>
    %16 = math.rsqrt %15 : vector<8x1xf32>
    %17 = vector.broadcast %16 : vector<8x1xf32> to vector<8x32xf32>
    %18 = arith.mulf %8, %17 : vector<8x32xf32>
    %19 = vector.broadcast %1 : vector<1x32xf32> to vector<8x32xf32>
    %20 = arith.mulf %18, %19 : vector<8x32xf32>
    %21 = vector.broadcast %2 : vector<1x32xf32> to vector<8x32xf32>
    %22 = arith.addf %20, %21 : vector<8x32xf32>
    %23 = arith.truncf %22 : vector<8x32xf32> to vector<8x32xbf16>
    %c0_9 = arith.constant 0 : index
    %c0_10 = arith.constant 0 : index
    %24 = vector.load %arg4[%c0_9, %c0_10] : memref<32x384xbf16, #tpu.memory_space<vmem>>, vector<32x384xbf16>
    %cst_11 = arith.constant dense<0.000000e+00> : vector<8x384xf32>
    %25 = tpu.matmul %23, %24, %cst_11 {dimension_numbers = #tpu.dot_dimension_numbers<[1], [0], [0], [1], [0, 0, 1, 1], [], []>} : vector<8x32xbf16>, vector<32x384xbf16>, vector<8x384xf32> -> vector<8x384xf32>
    %c0_12 = arith.constant 0 : index
    %c0_13 = arith.constant 0 : index
    %26 = vector.load %arg5[%c0_12, %c0_13] : memref<1x384xf32, #tpu.memory_space<vmem>>, vector<1x384xf32>
    %27 = vector.broadcast %26 : vector<1x384xf32> to vector<8x384xf32>
    %28 = arith.addf %25, %27 : vector<8x384xf32>
    %29 = arith.truncf %28 : vector<8x384xf32> to vector<8x384xbf16>
    %30 = vector.extract_strided_slice %29 {offsets = [0, 0], sizes = [8, 128], strides = [1, 1]} : vector<8x384xbf16> to vector<8x128xbf16>
    %31 = vector.shape_cast %30 : vector<8x128xbf16> to vector<1x8x128xbf16>
    %32 = vector.extract_strided_slice %29 {offsets = [0, 128], sizes = [8, 128], strides = [1, 1]} : vector<8x384xbf16> to vector<8x128xbf16>
    %33 = vector.shape_cast %32 : vector<8x128xbf16> to vector<1x8x128xbf16>
    %34 = vector.extract_strided_slice %29 {offsets = [0, 256], sizes = [8, 128], strides = [1, 1]} : vector<8x384xbf16> to vector<8x128xbf16>
    %35 = vector.shape_cast %34 : vector<8x128xbf16> to vector<1x8x128xbf16>
    "tpu.trace_start"() <{level = 10 : i32, message = "bqd,bkd->bqk"}> : () -> ()
    %cst_14 = arith.constant dense<0.000000e+00> : vector<1x8x8xf32>
    %36 = tpu.matmul %31, %33, %cst_14 {dimension_numbers = #tpu.dot_dimension_numbers<[2], [2], [1], [1], [0, 0, 0, 1, 1, 1], [0], [0]>} : vector<1x8x128xbf16>, vector<1x8x128xbf16>, vector<1x8x8xf32> -> vector<1x8x8xf32>
    "tpu.trace_stop"() : () -> ()
    %cst_15 = arith.constant dense<0xFF800000> : vector<1x8xf32>
    %37 = vector.multi_reduction <maximumf>, %36, %cst_15 [2] : vector<1x8x8xf32> to vector<1x8xf32>
    %38 = vector.shape_cast %37 : vector<1x8xf32> to vector<1x8x1xf32>
    %39 = vector.broadcast %38 : vector<1x8x1xf32> to vector<1x8x8xf32>
    %40 = arith.subf %36, %39 : vector<1x8x8xf32>
    %41 = math.exp %40 : vector<1x8x8xf32>
    %cst_16 = arith.constant dense<0.000000e+00> : vector<1x8xf32>
    %42 = vector.multi_reduction <add>, %41, %cst_16 [2] : vector<1x8x8xf32> to vector<1x8xf32>
    %43 = vector.shape_cast %42 : vector<1x8xf32> to vector<1x8x1xf32>
    %44 = tpu.reciprocal %43 {approx = true} : vector<1x8x1xf32> -> vector<1x8x1xf32>
    %45 = vector.broadcast %44 : vector<1x8x1xf32> to vector<1x8x8xf32>
    %46 = arith.mulf %41, %45 : vector<1x8x8xf32>
    %47 = arith.truncf %46 : vector<1x8x8xf32> to vector<1x8x8xbf16>
    "tpu.trace_start"() <{level = 10 : i32, message = "bqk,bkd->bqd"}> : () -> ()
    %cst_17 = arith.constant dense<0.000000e+00> : vector<1x8x128xf32>
    %48 = tpu.matmul %47, %35, %cst_17 {dimension_numbers = #tpu.dot_dimension_numbers<[2], [1], [1], [2], [0, 0, 0, 1, 1, 2], [0], [0]>} : vector<1x8x8xbf16>, vector<1x8x128xbf16>, vector<1x8x128xf32> -> vector<1x8x128xf32>
    "tpu.trace_stop"() : () -> ()
    %49 = vector.shape_cast %48 : vector<1x8x128xf32> to vector<8x128xf32>
    %50 = vector.extract_strided_slice %49 {offsets = [0, 0], sizes = [8, 32], strides = [1, 1]} : vector<8x128xf32> to vector<8x32xf32>
    %51 = arith.addf %0, %50 : vector<8x32xf32>
    %c0_18 = arith.constant 0 : index
    %c0_19 = arith.constant 0 : index
    %52 = vector.load %arg6[%c0_18, %c0_19] : memref<1x32xf32, #tpu.memory_space<vmem>>, vector<1x32xf32>
    %c0_20 = arith.constant 0 : index
    %c0_21 = arith.constant 0 : index
    %53 = vector.load %arg7[%c0_20, %c0_21] : memref<1x32xf32, #tpu.memory_space<vmem>>, vector<1x32xf32>
    %cst_22 = arith.constant dense<0.000000e+00> : vector<8xf32>
    %54 = vector.multi_reduction <add>, %51, %cst_22 [1] : vector<8x32xf32> to vector<8xf32>
    %55 = vector.shape_cast %54 : vector<8xf32> to vector<8x1xf32>
    %cst_23 = arith.constant 3.200000e+01 : f32
    %56 = vector.broadcast %cst_23 : f32 to vector<8x1xf32>
    %57 = arith.divf %55, %56 : vector<8x1xf32>
    %58 = vector.broadcast %57 : vector<8x1xf32> to vector<8x32xf32>
    %59 = arith.subf %51, %58 : vector<8x32xf32>
    %60 = arith.mulf %59, %59 : vector<8x32xf32>
    %cst_24 = arith.constant dense<0.000000e+00> : vector<8xf32>
    %61 = vector.multi_reduction <add>, %60, %cst_24 [1] : vector<8x32xf32> to vector<8xf32>
    %62 = vector.shape_cast %61 : vector<8xf32> to vector<8x1xf32>
    %cst_25 = arith.constant 3.200000e+01 : f32
    %63 = vector.broadcast %cst_25 : f32 to vector<8x1xf32>
    %64 = arith.divf %62, %63 : vector<8x1xf32>
    %cst_26 = arith.constant 9.99999974E-6 : f32
    %65 = vector.broadcast %cst_26 : f32 to vector<8x1xf32>
    %66 = arith.addf %64, %65 : vector<8x1xf32>
    %67 = math.rsqrt %66 : vector<8x1xf32>
    %68 = vector.broadcast %67 : vector<8x1xf32> to vector<8x32xf32>
    %69 = arith.mulf %59, %68 : vector<8x32xf32>
    %70 = vector.broadcast %52 : vector<1x32xf32> to vector<8x32xf32>
    %71 = arith.mulf %69, %70 : vector<8x32xf32>
    %72 = vector.broadcast %53 : vector<1x32xf32> to vector<8x32xf32>
    %73 = arith.addf %71, %72 : vector<8x32xf32>
    %74 = arith.truncf %73 : vector<8x32xf32> to vector<8x32xbf16>
    %c0_27 = arith.constant 0 : index
    %c0_28 = arith.constant 0 : index
    %75 = vector.load %arg8[%c0_27, %c0_28] : memref<32x128xbf16, #tpu.memory_space<vmem>>, vector<32x128xbf16>
    %cst_29 = arith.constant dense<0.000000e+00> : vector<8x128xf32>
    %76 = tpu.matmul %74, %75, %cst_29 {dimension_numbers = #tpu.dot_dimension_numbers<[1], [0], [0], [1], [0, 0, 1, 1], [], []>} : vector<8x32xbf16>, vector<32x128xbf16>, vector<8x128xf32> -> vector<8x128xf32>
    %c0_30 = arith.constant 0 : index
    %c0_31 = arith.constant 0 : index
    %77 = vector.load %arg9[%c0_30, %c0_31] : memref<1x128xf32, #tpu.memory_space<vmem>>, vector<1x128xf32>
    %78 = vector.broadcast %77 : vector<1x128xf32> to vector<8x128xf32>
    %79 = arith.addf %76, %78 : vector<8x128xf32>
    %80 = arith.truncf %79 : vector<8x128xf32> to vector<8x128xbf16>
    %cst_32 = arith.constant 0.000000e+00 : bf16
    %81 = vector.broadcast %cst_32 : bf16 to vector<8x128xbf16>
    %82 = arith.maximumf %80, %81 : vector<8x128xbf16>
    %c0_33 = arith.constant 0 : index
    %c0_34 = arith.constant 0 : index
    %83 = vector.load %arg10[%c0_33, %c0_34] : memref<128x32xbf16, #tpu.memory_space<vmem>>, vector<128x32xbf16>
    %cst_35 = arith.constant dense<0.000000e+00> : vector<8x32xf32>
    %84 = tpu.matmul %82, %83, %cst_35 {dimension_numbers = #tpu.dot_dimension_numbers<[1], [0], [0], [1], [0, 0, 1, 1], [], []>} : vector<8x128xbf16>, vector<128x32xbf16>, vector<8x32xf32> -> vector<8x32xf32>
    %c0_36 = arith.constant 0 : index
    %c0_37 = arith.constant 0 : index
    %85 = vector.load %arg11[%c0_36, %c0_37] : memref<1x32xf32, #tpu.memory_space<vmem>>, vector<1x32xf32>
    %86 = vector.broadcast %85 : vector<1x32xf32> to vector<8x32xf32>
    %87 = arith.addf %84, %86 : vector<8x32xf32>
    %88 = arith.addf %51, %87 : vector<8x32xf32>
    %c0_38 = arith.constant 0 : index
    %c0_39 = arith.constant 0 : index
    %89 = vector.load %arg12[%c0_38, %c0_39] : memref<8x32xf32, #tpu.memory_space<vmem>>, vector<8x32xf32>
    tpu.vector_store %arg12[%c0_38, %c0_39], %88 {strides = array<i32>} : memref<8x32xf32, #tpu.memory_space<vmem>>, vector<8x32xf32>,
    return
  }
  func.func @transform_0(%arg0: i32) -> (i32, i32) {
    %c0_i32 = arith.constant 0 : i32
    %c0_i32_0 = arith.constant 0 : i32
    return %arg0, %c0_i32 : i32, i32
  }
  func.func @transform_1(%arg0: i32) -> (i32, i32) {
    %c0_i32 = arith.constant 0 : i32
    %c0_i32_0 = arith.constant 0 : i32
    %c0_i32_1 = arith.constant 0 : i32
    return %c0_i32, %c0_i32_0 : i32, i32
  }
  func.func @transform_2(%arg0: i32) -> (i32, i32) {
    %c0_i32 = arith.constant 0 : i32
    %c0_i32_0 = arith.constant 0 : i32
    %c0_i32_1 = arith.constant 0 : i32
    return %c0_i32, %c0_i32_0 : i32, i32
  }
  func.func @transform_3(%arg0: i32) -> (i32, i32) {
    %c0_i32 = arith.constant 0 : i32
    %c0_i32_0 = arith.constant 0 : i32
    %c0_i32_1 = arith.constant 0 : i32
    return %c0_i32, %c0_i32_0 : i32, i32
  }
  func.func @transform_4(%arg0: i32) -> (i32, i32) {
    %c0_i32 = arith.constant 0 : i32
    %c0_i32_0 = arith.constant 0 : i32
    %c0_i32_1 = arith.constant 0 : i32
    return %c0_i32, %c0_i32_0 : i32, i32
  }
  func.func @transform_5(%arg0: i32) -> (i32, i32) {
    %c0_i32 = arith.constant 0 : i32
    %c0_i32_0 = arith.constant 0 : i32
    %c0_i32_1 = arith.constant 0 : i32
    return %c0_i32, %c0_i32_0 : i32, i32
  }
  func.func @transform_6(%arg0: i32) -> (i32, i32) {
    %c0_i32 = arith.constant 0 : i32
    %c0_i32_0 = arith.constant 0 : i32
    %c0_i32_1 = arith.constant 0 : i32
    return %c0_i32, %c0_i32_0 : i32, i32
  }
  func.func @transform_7(%arg0: i32) -> (i32, i32) {
    %c0_i32 = arith.constant 0 : i32
    %c0_i32_0 = arith.constant 0 : i32
    %c0_i32_1 = arith.constant 0 : i32
    return %c0_i32, %c0_i32_0 : i32, i32
  }
  func.func @transform_8(%arg0: i32) -> (i32, i32) {
    %c0_i32 = arith.constant 0 : i32
    %c0_i32_0 = arith.constant 0 : i32
    %c0_i32_1 = arith.constant 0 : i32
    return %c0_i32, %c0_i32_0 : i32, i32
  }
  func.func @transform_9(%arg0: i32) -> (i32, i32) {
    %c0_i32 = arith.constant 0 : i32
    %c0_i32_0 = arith.constant 0 : i32
    %c0_i32_1 = arith.constant 0 : i32
    return %c0_i32, %c0_i32_0 : i32, i32
  }
  func.func @transform_10(%arg0: i32) -> (i32, i32) {
    %c0_i32 = arith.constant 0 : i32
    %c0_i32_0 = arith.constant 0 : i32
    %c0_i32_1 = arith.constant 0 : i32
    return %c0_i32, %c0_i32_0 : i32, i32
  }
  func.func @transform_11(%arg0: i32) -> (i32, i32) {
    %c0_i32 = arith.constant 0 : i32
    %c0_i32_0 = arith.constant 0 : i32
    return %arg0, %c0_i32 : i32, i32
  }
}

module attributes {stable_mosaic.version = 11 : i64} {
  func.func @kernel(%arg0: i32, %arg1: memref<8x32xf32, #tpu.memory_space<vmem>>, %arg2: memref<1x32xf32, #tpu.memory_space<vmem>>, %arg3: memref<1x32xf32, #tpu.memory_space<vmem>>, %arg4: memref<32x384xbf16, #tpu.memory_space<vmem>>, %arg5: memref<1x384xf32, #tpu.memory_space<vmem>>, %arg6: memref<1x32xf32, #tpu.memory_space<vmem>>, %arg7: memref<1x32xf32, #tpu.memory_space<vmem>>, %arg8: memref<32x128xbf16, #tpu.memory_space<vmem>>, %arg9: memref<1x128xf32, #tpu.memory_space<vmem>>, %arg10: memref<128x32xbf16, #tpu.memory_space<vmem>>, %arg11: memref<1x32xf32, #tpu.memory_space<vmem>>, %arg12: memref<8x32xf32, #tpu.memory_space<vmem>>) attributes {dimension_semantics = [#tpu.dimension_semantics<parallel>], iteration_bounds = array<i64: 2>, scalar_prefetch = 0 : i64, scratch_operands = 0 : i64, tpu.core_type = #tpu.core_type<tc>, window_params = [{transform_indices = @transform_0, window_bounds = array<i64: 8, 32>}, {pipeline_mode = #tpu.pipeline_mode<synchronous>, transform_indices = @transform_1, window_bounds = array<i64: 1, 32>}, {pipeline_mode = #tpu.pipeline_mode<synchronous>, transform_indices = @transform_2, window_bounds = array<i64: 1, 32>}, {pipeline_mode = #tpu.pipeline_mode<synchronous>, transform_indices = @transform_3, window_bounds = array<i64: 32, 384>}, {pipeline_mode = #tpu.pipeline_mode<synchronous>, transform_indices = @transform_4, window_bounds = array<i64: 1, 384>}, {pipeline_mode = #tpu.pipeline_mode<synchronous>, transform_indices = @transform_5, window_bounds = array<i64: 1, 32>}, {pipeline_mode = #tpu.pipeline_mode<synchronous>, transform_indices = @transform_6, window_bounds = array<i64: 1, 32>}, {pipeline_mode = #tpu.pipeline_mode<synchronous>, transform_indices = @transform_7, window_bounds = array<i64: 32, 128>}, {pipeline_mode = #tpu.pipeline_mode<synchronous>, transform_indices = @transform_8, window_bounds = array<i64: 1, 128>}, {pipeline_mode = #tpu.pipeline_mode<synchronous>, transform_indices = @transform_9, window_bounds = array<i64: 128, 32>}, {pipeline_mode = #tpu.pipeline_mode<synchronous>, transform_indices = @transform_10, window_bounds = array<i64: 1, 32>}, {transform_indices = @transform_11, window_bounds = array<i64: 8, 32>}]} {
    %c0 = arith.constant 0 : index
    %c0_0 = arith.constant 0 : index
    %0 = vector.load %arg1[%c0, %c0_0] : memref<8x32xf32, #tpu.memory_space<vmem>>, vector<8x32xf32>
    %c0_1 = arith.constant 0 : index
    %c0_2 = arith.constant 0 : index
    %1 = vector.load %arg2[%c0_1, %c0_2] : memref<1x32xf32, #tpu.memory_space<vmem>>, vector<1x32xf32>
    %c0_3 = arith.constant 0 : index
    %c0_4 = arith.constant 0 : index
    %2 = vector.load %arg3[%c0_3, %c0_4] : memref<1x32xf32, #tpu.memory_space<vmem>>, vector<1x32xf32>
    %cst = arith.constant dense<0.000000e+00> : vector<8xf32>
    %3 = vector.multi_reduction <add>, %0, %cst [1] : vector<8x32xf32> to vector<8xf32>
    %4 = vector.shape_cast %3 : vector<8xf32> to vector<8x1xf32>
    %cst_5 = arith.constant 3.200000e+01 : f32
    %5 = vector.broadcast %cst_5 : f32 to vector<8x1xf32>
    %6 = arith.divf %4, %5 : vector<8x1xf32>
    %7 = vector.broadcast %6 : vector<8x1xf32> to vector<8x32xf32>
    %8 = arith.subf %0, %7 : vector<8x32xf32>
    %9 = arith.mulf %8, %8 : vector<8x32xf32>
    %cst_6 = arith.constant dense<0.000000e+00> : vector<8xf32>
    %10 = vector.multi_reduction <add>, %9, %cst_6 [1] : vector<8x32xf32> to vector<8xf32>
    %11 = vector.shape_cast %10 : vector<8xf32> to vector<8x1xf32>
    %cst_7 = arith.constant 3.200000e+01 : f32
    %12 = vector.broadcast %cst_7 : f32 to vector<8x1xf32>
    %13 = arith.divf %11, %12 : vector<8x1xf32>
    %cst_8 = arith.constant 9.99999974E-6 : f32
    %14 = vector.broadcast %cst_8 : f32 to vector<8x1xf32>
    %15 = arith.addf %13, %14 : vector<8x1xf32>
    %16 = math.rsqrt %15 : vector<8x1xf32>
    %17 = vector.broadcast %16 : vector<8x1xf32> to vector<8x32xf32>
    %18 = arith.mulf %8, %17 : vector<8x32xf32>
    %19 = vector.broadcast %1 : vector<1x32xf32> to vector<8x32xf32>
    %20 = arith.mulf %18, %19 : vector<8x32xf32>
    %21 = vector.broadcast %2 : vector<1x32xf32> to vector<8x32xf32>
    %22 = arith.addf %20, %21 : vector<8x32xf32>
    %23 = arith.truncf %22 : vector<8x32xf32> to vector<8x32xbf16>
    %c0_9 = arith.constant 0 : index
    %c0_10 = arith.constant 0 : index
    %24 = vector.load %arg4[%c0_9, %c0_10] : memref<32x384xbf16, #tpu.memory_space<vmem>>, vector<32x384xbf16>
    %cst_11 = arith.constant dense<0.000000e+00> : vector<8x384xf32>
    %25 = tpu.matmul %23, %24, %cst_11 {dimension_numbers = #tpu.dot_dimension_numbers<[1], [0], [0], [1], [0, 0, 1, 1], [], []>} : vector<8x32xbf16>, vector<32x384xbf16>, vector<8x384xf32> -> vector<8x384xf32>
    %c0_12 = arith.constant 0 : index
    %c0_13 = arith.constant 0 : index
    %26 = vector.load %arg5[%c0_12, %c0_13] : memref<1x384xf32, #tpu.memory_space<vmem>>, vector<1x384xf32>
    %27 = vector.broadcast %26 : vector<1x384xf32> to vector<8x384xf32>
    %28 = arith.addf %25, %27 : vector<8x384xf32>
    %29 = arith.truncf %28 : vector<8x384xf32> to vector<8x384xbf16>
    %30 = vector.extract_strided_slice %29 {offsets = [0, 0], sizes = [8, 128], strides = [1, 1]} : vector<8x384xbf16> to vector<8x128xbf16>
    %31 = vector.shape_cast %30 : vector<8x128xbf16> to vector<1x8x128xbf16>
    %32 = vector.extract_strided_slice %29 {offsets = [0, 128], sizes = [8, 128], strides = [1, 1]} : vector<8x384xbf16> to vector<8x128xbf16>
    %33 = vector.shape_cast %32 : vector<8x128xbf16> to vector<1x8x128xbf16>
    %34 = vector.extract_strided_slice %29 {offsets = [0, 256], sizes = [8, 128], strides = [1, 1]} : vector<8x384xbf16> to vector<8x128xbf16>
    %35 = vector.shape_cast %34 : vector<8x128xbf16> to vector<1x8x128xbf16>
    "tpu.trace_start"() <{level = 10 : i32, message = "bqd,bkd->bqk"}> : () -> ()
    %cst_14 = arith.constant dense<0.000000e+00> : vector<1x8x8xf32>
    %36 = tpu.matmul %31, %33, %cst_14 {dimension_numbers = #tpu.dot_dimension_numbers<[2], [2], [1], [1], [0, 0, 0, 1, 1, 1], [0], [0]>} : vector<1x8x128xbf16>, vector<1x8x128xbf16>, vector<1x8x8xf32> -> vector<1x8x8xf32>
    "tpu.trace_stop"() : () -> ()
    %cst_15 = arith.constant dense<0xFF800000> : vector<1x8xf32>
    %37 = vector.multi_reduction <maximumf>, %36, %cst_15 [2] : vector<1x8x8xf32> to vector<1x8xf32>
    %38 = vector.shape_cast %37 : vector<1x8xf32> to vector<1x8x1xf32>
    %39 = vector.broadcast %38 : vector<1x8x1xf32> to vector<1x8x8xf32>
    %40 = arith.subf %36, %39 : vector<1x8x8xf32>
    %41 = math.exp %40 : vector<1x8x8xf32>
    %cst_16 = arith.constant dense<0.000000e+00> : vector<1x8xf32>
    %42 = vector.multi_reduction <add>, %41, %cst_16 [2] : vector<1x8x8xf32> to vector<1x8xf32>
    %43 = vector.shape_cast %42 : vector<1x8xf32> to vector<1x8x1xf32>
    %44 = tpu.reciprocal %43 {approx = true} : vector<1x8x1xf32> -> vector<1x8x1xf32>
    %45 = vector.broadcast %44 : vector<1x8x1xf32> to vector<1x8x8xf32>
    %46 = arith.mulf %41, %45 : vector<1x8x8xf32>
    %47 = arith.truncf %46 : vector<1x8x8xf32> to vector<1x8x8xbf16>
    "tpu.trace_start"() <{level = 10 : i32, message = "bqk,bkd->bqd"}> : () -> ()
    %cst_17 = arith.constant dense<0.000000e+00> : vector<1x8x128xf32>
    %48 = tpu.matmul %47, %35, %cst_17 {dimension_numbers = #tpu.dot_dimension_numbers<[2], [1], [1], [2], [0, 0, 0, 1, 1, 2], [0], [0]>} : vector<1x8x8xbf16>, vector<1x8x128xbf16>, vector<1x8x128xf32> -> vector<1x8x128xf32>
    "tpu.trace_stop"() : () -> ()
    %49 = vector.shape_cast %48 : vector<1x8x128xf32> to vector<8x128xf32>
    %50 = vector.extract_strided_slice %49 {offsets = [0, 0], sizes = [8, 32], strides = [1, 1]} : vector<8x128xf32> to vector<8x32xf32>
    %51 = arith.addf %0, %50 : vector<8x32xf32>
    %c0_18 = arith.constant 0 : index
    %c0_19 = arith.constant 0 : index
    %52 = vector.load %arg6[%c0_18, %c0_19] : memref<1x32xf32, #tpu.memory_space<vmem>>, vector<1x32xf32>
    %c0_20 = arith.constant 0 : index
    %c0_21 = arith.constant 0 : index
    %53 = vector.load %arg7[%c0_20, %c0_21] : memref<1x32xf32, #tpu.memory_space<vmem>>, vector<1x32xf32>
    %cst_22 = arith.constant dense<0.000000e+00> : vector<8xf32>
    %54 = vector.multi_reduction <add>, %51, %cst_22 [1] : vector<8x32xf32> to vector<8xf32>
    %55 = vector.shape_cast %54 : vector<8xf32> to vector<8x1xf32>
    %cst_23 = arith.constant 3.200000e+01 : f32
    %56 = vector.broadcast %cst_23 : f32 to vector<8x1xf32>
    %57 = arith.divf %55, %56 : vector<8x1xf32>
    %58 = vector.broadcast %57 : vector<8x1xf32> to vector<8x32xf32>
    %59 = arith.subf %51, %58 : vector<8x32xf32>
    %60 = arith.mulf %59, %59 : vector<8x32xf32>
    %cst_24 = arith.constant dense<0.000000e+00> : vector<8xf32>
    %61 = vector.multi_reduction <add>, %60, %cst_24 [1] : vector<8x32xf32> to vector<8xf32>
    %62 = vector.shape_cast %61 : vector<8xf32> to vector<8x1xf32>
    %cst_25 = arith.constant 3.200000e+01 : f32
    %63 = vector.broadcast %cst_25 : f32 to vector<8x1xf32>
    %64 = arith.divf %62, %63 : vector<8x1xf32>
    %cst_26 = arith.constant 9.99999974E-6 : f32
    %65 = vector.broadcast %cst_26 : f32 to vector<8x1xf32>
    %66 = arith.addf %64, %65 : vector<8x1xf32>
    %67 = math.rsqrt %66 : vector<8x1xf32>
    %68 = vector.broadcast %67 : vector<8x1xf32> to vector<8x32xf32>
    %69 = arith.mulf %59, %68 : vector<8x32xf32>
    %70 = vector.broadcast %52 : vector<1x32xf32> to vector<8x32xf32>
    %71 = arith.mulf %69, %70 : vector<8x32xf32>
    %72 = vector.broadcast %53 : vector<1x32xf32> to vector<8x32xf32>
    %73 = arith.addf %71, %72 : vector<8x32xf32>
    %74 = arith.truncf %73 : vector<8x32xf32> to vector<8x32xbf16>
    %c0_27 = arith.constant 0 : index
    %c0_28 = arith.constant 0 : index
    %75 = vector.load %arg8[%c0_27, %c0_28] : memref<32x128xbf16, #tpu.memory_space<vmem>>, vector<32x128xbf16>
    %cst_29 = arith.constant dense<0.000000e+00> : vector<8x128xf32>
    %76 = tpu.matmul %74, %75, %cst_29 {dimension_numbers = #tpu.dot_dimension_numbers<[1], [0], [0], [1], [0, 0, 1, 1], [], []>} : vector<8x32xbf16>, vector<32x128xbf16>, vector<8x128xf32> -> vector<8x128xf32>
    %c0_30 = arith.constant 0 : index
    %c0_31 = arith.constant 0 : index
    %77 = vector.load %arg9[%c0_30, %c0_31] : memref<1x128xf32, #tpu.memory_space<vmem>>, vector<1x128xf32>
    %78 = vector.broadcast %77 : vector<1x128xf32> to vector<8x128xf32>
    %79 = arith.addf %76, %78 : vector<8x128xf32>
    %80 = arith.truncf %79 : vector<8x128xf32> to vector<8x128xbf16>
    %cst_32 = arith.constant 0.000000e+00 : bf16
    %81 = vector.broadcast %cst_32 : bf16 to vector<8x128xbf16>
    %82 = arith.maximumf %80, %81 : vector<8x128xbf16>
    %c0_33 = arith.constant 0 : index
    %c0_34 = arith.constant 0 : index
    %83 = vector.load %arg10[%c0_33, %c0_34] : memref<128x32xbf16, #tpu.memory_space<vmem>>, vector<128x32xbf16>
    %cst_35 = arith.constant dense<0.000000e+00> : vector<8x32xf32>
    %84 = tpu.matmul %82, %83, %cst_35 {dimension_numbers = #tpu.dot_dimension_numbers<[1], [0], [0], [1], [0, 0, 1, 1], [], []>} : vector<8x128xbf16>, vector<128x32xbf16>, vector<8x32xf32> -> vector<8x32xf32>
    %c0_36 = arith.constant 0 : index
    %c0_37 = arith.constant 0 : index
    %85 = vector.load %arg11[%c0_36, %c0_37] : memref<1x32xf32, #tpu.memory_space<vmem>>, vector<1x32xf32>
    %86 = vector.broadcast %85 : vector<1x32xf32> to vector<8x32xf32>
    %87 = arith.addf %84, %86 : vector<8x32xf32>
    %88 = arith.addf %51, %87 : vector<8x32xf32>
    %c0_38 = arith.constant 0 : index
    %c0_39 = arith.constant 0 : index
    %89 = vector.load %arg12[%c0_38, %c0_39] : memref<8x32xf32, #tpu.memory_space<vmem>>, vector<8x32xf32>
    tpu.vector_store %arg12[%c0_38, %c0_39], %88 {strides = array<i32>} : memref<8x32xf32, #tpu.memory_space<vmem>>, vector<8x32xf32>,
    return
  }
  func.func @transform_0(%arg0: i32) -> (i32, i32) {
    %c0_i32 = arith.constant 0 : i32
    %c0_i32_0 = arith.constant 0 : i32
    return %arg0, %c0_i32 : i32, i32
  }
  func.func @transform_1(%arg0: i32) -> (i32, i32) {
    %c0_i32 = arith.constant 0 : i32
    %c0_i32_0 = arith.constant 0 : i32
    %c0_i32_1 = arith.constant 0 : i32
    return %c0_i32, %c0_i32_0 : i32, i32
  }
  func.func @transform_2(%arg0: i32) -> (i32, i32) {
    %c0_i32 = arith.constant 0 : i32
    %c0_i32_0 = arith.constant 0 : i32
    %c0_i32_1 = arith.constant 0 : i32
    return %c0_i32, %c0_i32_0 : i32, i32
  }
  func.func @transform_3(%arg0: i32) -> (i32, i32) {
    %c0_i32 = arith.constant 0 : i32
    %c0_i32_0 = arith.constant 0 : i32
    %c0_i32_1 = arith.constant 0 : i32
    return %c0_i32, %c0_i32_0 : i32, i32
  }
  func.func @transform_4(%arg0: i32) -> (i32, i32) {
    %c0_i32 = arith.constant 0 : i32
    %c0_i32_0 = arith.constant 0 : i32
    %c0_i32_1 = arith.constant 0 : i32
    return %c0_i32, %c0_i32_0 : i32, i32
  }
  func.func @transform_5(%arg0: i32) -> (i32, i32) {
    %c0_i32 = arith.constant 0 : i32
    %c0_i32_0 = arith.constant 0 : i32
    %c0_i32_1 = arith.constant 0 : i32
    return %c0_i32, %c0_i32_0 : i32, i32
  }
  func.func @transform_6(%arg0: i32) -> (i32, i32) {
    %c0_i32 = arith.constant 0 : i32
    %c0_i32_0 = arith.constant 0 : i32
    %c0_i32_1 = arith.constant 0 : i32
    return %c0_i32, %c0_i32_0 : i32, i32
  }
  func.func @transform_7(%arg0: i32) -> (i32, i32) {
    %c0_i32 = arith.constant 0 : i32
    %c0_i32_0 = arith.constant 0 : i32
    %c0_i32_1 = arith.constant 0 : i32
    return %c0_i32, %c0_i32_0 : i32, i32
  }
  func.func @transform_8(%arg0: i32) -> (i32, i32) {
    %c0_i32 = arith.constant 0 : i32
    %c0_i32_0 = arith.constant 0 : i32
    %c0_i32_1 = arith.constant 0 : i32
    return %c0_i32, %c0_i32_0 : i32, i32
  }
  func.func @transform_9(%arg0: i32) -> (i32, i32) {
    %c0_i32 = arith.constant 0 : i32
    %c0_i32_0 = arith.constant 0 : i32
    %c0_i32_1 = arith.constant 0 : i32
    return %c0_i32, %c0_i32_0 : i32, i32
  }
  func.func @transform_10(%arg0: i32) -> (i32, i32) {
    %c0_i32 = arith.constant 0 : i32
    %c0_i32_0 = arith.constant 0 : i32
    %c0_i32_1 = arith.constant 0 : i32
    return %c0_i32, %c0_i32_0 : i32, i32
  }
  func.func @transform_11(%arg0: i32) -> (i32, i32) {
    %c0_i32 = arith.constant 0 : i32
    %c0_i32_0 = arith.constant 0 : i32
    return %arg0, %c0_i32 : i32, i32
  }
}

</mosaic_0001>

<llo_original>
// kernel: tpu_custom_call.1
$region0: #{tpu_custom_call.1}
  #allocation0 [shape = 'u32[]', space=smem, size = 0x4, offset = 0x4, fixed_abs, tag = 'smem constant byte address 0x4 - core index']
  #allocation1 [shape = 'u32[144,128]{1,0:T(1,128)}', space=vmem, size = 0x12000, scoped, tag = 'internal scratch']
  %s0 = inlined_call_operand.vmem [shape: f32[16,32], index: 0, kind: input, shape index: {}]
  %s1 = inlined_call_operand.hbm [shape: f32[1,32], index: 1, kind: input, shape index: {}]
  %s2 = inlined_call_operand.hbm [shape: f32[1,32], index: 2, kind: input, shape index: {}]
  %s3 = inlined_call_operand.vmem [shape: bf16[32,384], index: 3, kind: input, shape index: {}]
  %s4 = inlined_call_operand.hbm [shape: f32[1,384], index: 4, kind: input, shape index: {}]
  %s5 = inlined_call_operand.hbm [shape: f32[1,32], index: 5, kind: input, shape index: {}]
  %s6 = inlined_call_operand.hbm [shape: f32[1,32], index: 6, kind: input, shape index: {}]
  %s7 = inlined_call_operand.vmem [shape: bf16[32,128], index: 7, kind: input, shape index: {}]
  %s8 = inlined_call_operand.hbm [shape: f32[1,128], index: 8, kind: input, shape index: {}]
  %s9 = inlined_call_operand.vmem [shape: bf16[128,32], index: 9, kind: input, shape index: {}]
  %s10 = inlined_call_operand.vmem [shape: f32[1,32], index: 10, kind: input, shape index: {}]
  %s11 = inlined_call_operand.hbm [shape: f32[16,32], index: 11, kind: output, shape index: {}]
  %s12 = sld [smem:[#allocation0]]
  $region101: #{tpu_custom_call.1} parent=0
    _
  %s14 = ssub.s32 1, %s12
  %s15 = scalar_select 0, %s14, %s12
  $region1: #{tpu_custom_call.1} parent=0
    #allocation2 [shape = 'u8[512]{0}', space=vmem, size = 0x400, scoped, tag = 'input window, operand 1, single buffered']
    #allocation3 [shape = 's32[2]{0}', space=sflag, size = 0x8, scoped, tag = 'scoped memory for tpu_custom_call.1']
    #allocation4 [shape = 's32[2]{0}', space=sflag, size = 0x8, scoped, tag = 'scoped memory for tpu_custom_call.1']
    #allocation5 [shape = 'u8[512]{0}', space=vmem, size = 0x400, scoped, tag = 'input window, operand 2, single buffered']
    #allocation6 [shape = 's32[1]{0}', space=sflag, size = 0x4, scoped, tag = 'scoped memory for tpu_custom_call.1']
    #allocation7 [shape = 'u8[1536]{0}', space=vmem, size = 0x800, scoped, tag = 'input window, operand 4, single buffered']
    #allocation8 [shape = 'u8[512]{0}', space=vmem, size = 0x400, scoped, tag = 'input window, operand 5, single buffered']
    #allocation9 [shape = 's32[1]{0}', space=sflag, size = 0x4, scoped, tag = 'scoped memory for tpu_custom_call.1']
    #allocation10 [shape = 'u8[512]{0}', space=vmem, size = 0x400, scoped, tag = 'input window, operand 6, single buffered']
    #allocation11 [shape = 'u8[512]{0}', space=vmem, size = 0x400, scoped, tag = 'input window, operand 8, single buffered']
    #allocation12 [shape = 's32[1]{0}', space=sflag, size = 0x4, scoped, tag = 'scoped memory for tpu_custom_call.1']
    #allocation13 [shape = 'u8[8192]{0}', space=vmem, size = 0x2000, scoped, tag = 'output window, operand 0']
    %16 = vsyncpa [#allocation3], 0
    %17 = vsyncpa [#allocation6], 0
    %18 = vsyncpa [#allocation9], 0
    %19 = vsyncpa [#allocation12], 0
    %20 = vsyncpa [#allocation4], 0
    %s21 = scalar_lea.sflag [#allocation4], 1
    %22 = vsyncpa %s21, 0
    loop: start=0, step=1, limit=4
    $region2: #{tpu_custom_call.1} parent=1 // loop_pre_header
      _
    $region3: #{tpu_custom_call.1} parent=1 // loop_header
      %s24 = sphi 0, %s28
      %p25 = scmp.ge.s32.totalorder %s24, 4
      %s34 = sphi 0, %s36
      %s37 = sphi 0, %s34
      %s38 = sphi 0, %s37
      %s54 = sphi 0, %s38
      %s58 = sphi 0, %s58
      %s60 = sphi 0, %s58
      %s61 = sphi 0, %s60
      %s75 = sphi 0, %s61
      %s79 = sphi 0, %s79
      %s81 = sphi 0, %s79
      %s82 = sphi 0, %s81
      %s96 = sphi 0, %s82
      %s100 = sphi 0, %s100
      %s102 = sphi 0, %s100
      %s103 = sphi 0, %s102
      %s117 = sphi 0, %s103
      %s121 = sphi 0, %s121
      %s123 = sphi 0, %s121
      %s124 = sphi 0, %s123
      %s138 = sphi 0, %s124
      %s142 = sphi 0, %s142
      %s144 = sphi 0, %s142
      %s145 = sphi 0, %s144
      %s159 = sphi 0, %s145
      %s163 = sphi 0, %s163
      %s165 = sphi 0, %s163
      %s166 = sphi 0, %s165
      %s180 = sphi 0, %s166
      %s184 = sphi 0, %s184
      %s186 = sphi 0, %s184
      %s187 = sphi 0, %s186
      %s201 = sphi 0, %s187
      %s205 = sphi 0, %s205
      %s207 = sphi 0, %s205
      %s208 = sphi 0, %s207
      %s222 = sphi 0, %s208
      %s226 = sphi 0, %s226
      %s228 = sphi 0, %s226
      %s229 = sphi 0, %s228
      %s243 = sphi 0, %s229
      %s247 = sphi 0, %s247
      %s249 = sphi 0, %s247
      %s250 = sphi 0, %s249
      %s264 = sphi 0, %s250
      %s270 = sphi 0, %s272
      %s273 = sphi 0, %s270
      %s274 = sphi 0, %s273
      %s290 = sphi 0, %s274
    $region4: #{tpu_custom_call.1} parent=1 // loop_header_branch
      %27 = sbr.rel (%p25) target = $region8
    $region5: #{tpu_custom_call.1} parent=1 // loop_body
      %s29 = ssub.s32 %s24, 1
      %s30 = ssub.s32 %s24, 2
      %s31 = sadd.s32 %s24, 1
      %s32 = ssub.s32 %s24, %s31
      %p33 = scmp.eq.s32.totalorder %s32, 0
      %s35 = sadd.s32 %s34, 1
      %s36 = scalar_select %p33, %s34, %s35
      %p39 = pneg %p33
      %p40 = scmp.eq.s32.totalorder %s24, 1
      %p41 = por %p39, %p40
      %p42 = scmp.ne.s32.totalorder %s34, %s37
      %p43 = scmp.eq.s32.totalorder %s24, 0
      %p44 = por %p42, %p43
      %p45 = scmp.ne.s32.totalorder %s34, %s37
      %p46 = scmp.eq.s32.totalorder %s29, 1
      %p47 = por %p45, %p46
      %p48 = scmp.ne.s32.totalorder %s37, %s38
      %p49 = scmp.eq.s32.totalorder %s29, 0
      %p50 = por %p48, %p49
      %p51 = scmp.ne.s32.totalorder %s37, %s38
      %p52 = scmp.eq.s32.totalorder %s30, 1
      %p53 = por %p51, %p52
      %p55 = scmp.ne.s32.totalorder %s38, %s54
      %p56 = scmp.eq.s32.totalorder %s30, 0
      %p57 = por %p55, %p56
      %s59 = sadd.s32 %s58, 1
      %p62 = scmp.eq.s32.totalorder %s24, 1
      %p63 = scmp.ne.s32.totalorder %s58, %s60
      %p64 = scmp.eq.s32.totalorder %s24, 0
      %p65 = por %p63, %p64
      %p66 = scmp.ne.s32.totalorder %s58, %s60
      %p67 = scmp.eq.s32.totalorder %s29, 1
      %p68 = por %p66, %p67
      %p69 = scmp.ne.s32.totalorder %s60, %s61
      %p70 = scmp.eq.s32.totalorder %s29, 0
      %p71 = por %p69, %p70
      %p72 = scmp.ne.s32.totalorder %s60, %s61
      %p73 = scmp.eq.s32.totalorder %s30, 1
      %p74 = por %p72, %p73
      %p76 = scmp.ne.s32.totalorder %s61, %s75
      %p77 = scmp.eq.s32.totalorder %s30, 0
      %p78 = por %p76, %p77
      %s80 = sadd.s32 %s79, 1
      %p83 = scmp.eq.s32.totalorder %s24, 1
      %p84 = scmp.ne.s32.totalorder %s79, %s81
      %p85 = scmp.eq.s32.totalorder %s24, 0
      %p86 = por %p84, %p85
      %p87 = scmp.ne.s32.totalorder %s79, %s81
      %p88 = scmp.eq.s32.totalorder %s29, 1
      %p89 = por %p87, %p88
      %p90 = scmp.ne.s32.totalorder %s81, %s82
      %p91 = scmp.eq.s32.totalorder %s29, 0
      %p92 = por %p90, %p91
      %p93 = scmp.ne.s32.totalorder %s81, %s82
      %p94 = scmp.eq.s32.totalorder %s30, 1
      %p95 = por %p93, %p94
      %p97 = scmp.ne.s32.totalorder %s82, %s96
      %p98 = scmp.eq.s32.totalorder %s30, 0
      %p99 = por %p97, %p98
      %s101 = sadd.s32 %s100, 1
      %p104 = scmp.eq.s32.totalorder %s24, 1
      %p105 = scmp.ne.s32.totalorder %s100, %s102
      %p106 = scmp.eq.s32.totalorder %s24, 0
      %p107 = por %p105, %p106
      %p108 = scmp.ne.s32.totalorder %s100, %s102
      %p109 = scmp.eq.s32.totalorder %s29, 1
      %p110 = por %p108, %p109
      %p111 = scmp.ne.s32.totalorder %s102, %s103
      %p112 = scmp.eq.s32.totalorder %s29, 0
      %p113 = por %p111, %p112
      %p114 = scmp.ne.s32.totalorder %s102, %s103
      %p115 = scmp.eq.s32.totalorder %s30, 1
      %p116 = por %p114, %p115
      %p118 = scmp.ne.s32.totalorder %s103, %s117
      %p119 = scmp.eq.s32.totalorder %s30, 0
      %p120 = por %p118, %p119
      %s122 = sadd.s32 %s121, 1
      %p125 = scmp.eq.s32.totalorder %s24, 1
      %p126 = scmp.ne.s32.totalorder %s121, %s123
      %p127 = scmp.eq.s32.totalorder %s24, 0
      %p128 = por %p126, %p127
      %p129 = scmp.ne.s32.totalorder %s121, %s123
      %p130 = scmp.eq.s32.totalorder %s29, 1
      %p131 = por %p129, %p130
      %p132 = scmp.ne.s32.totalorder %s123, %s124
      %p133 = scmp.eq.s32.totalorder %s29, 0
      %p134 = por %p132, %p133
      %p135 = scmp.ne.s32.totalorder %s123, %s124
      %p136 = scmp.eq.s32.totalorder %s30, 1
      %p137 = por %p135, %p136
      %p139 = scmp.ne.s32.totalorder %s124, %s138
      %p140 = scmp.eq.s32.totalorder %s30, 0
      %p141 = por %p139, %p140
      %s143 = sadd.s32 %s142, 1
      %p146 = scmp.eq.s32.totalorder %s24, 1
      %p147 = scmp.ne.s32.totalorder %s142, %s144
      %p148 = scmp.eq.s32.totalorder %s24, 0
      %p149 = por %p147, %p148
      %p150 = scmp.ne.s32.totalorder %s142, %s144
      %p151 = scmp.eq.s32.totalorder %s29, 1
      %p152 = por %p150, %p151
      %p153 = scmp.ne.s32.totalorder %s144, %s145
      %p154 = scmp.eq.s32.totalorder %s29, 0
      %p155 = por %p153, %p154
      %p156 = scmp.ne.s32.totalorder %s144, %s145
      %p157 = scmp.eq.s32.totalorder %s30, 1
      %p158 = por %p156, %p157
      %p160 = scmp.ne.s32.totalorder %s145, %s159
      %p161 = scmp.eq.s32.totalorder %s30, 0
      %p162 = por %p160, %p161
      %s164 = sadd.s32 %s163, 1
      %p167 = scmp.eq.s32.totalorder %s24, 1
      %p168 = scmp.ne.s32.totalorder %s163, %s165
      %p169 = scmp.eq.s32.totalorder %s24, 0
      %p170 = por %p168, %p169
      %p171 = scmp.ne.s32.totalorder %s163, %s165
      %p172 = scmp.eq.s32.totalorder %s29, 1
      %p173 = por %p171, %p172
      %p174 = scmp.ne.s32.totalorder %s165, %s166
      %p175 = scmp.eq.s32.totalorder %s29, 0
      %p176 = por %p174, %p175
      %p177 = scmp.ne.s32.totalorder %s165, %s166
      %p178 = scmp.eq.s32.totalorder %s30, 1
      %p179 = por %p177, %p178
      %p181 = scmp.ne.s32.totalorder %s166, %s180
      %p182 = scmp.eq.s32.totalorder %s30, 0
      %p183 = por %p181, %p182
      %s185 = sadd.s32 %s184, 1
      %p188 = scmp.eq.s32.totalorder %s24, 1
      %p189 = scmp.ne.s32.totalorder %s184, %s186
      %p190 = scmp.eq.s32.totalorder %s24, 0
      %p191 = por %p189, %p190
      %p192 = scmp.ne.s32.totalorder %s184, %s186
      %p193 = scmp.eq.s32.totalorder %s29, 1
      %p194 = por %p192, %p193
      %p195 = scmp.ne.s32.totalorder %s186, %s187
      %p196 = scmp.eq.s32.totalorder %s29, 0
      %p197 = por %p195, %p196
      %p198 = scmp.ne.s32.totalorder %s186, %s187
      %p199 = scmp.eq.s32.totalorder %s30, 1
      %p200 = por %p198, %p199
      %p202 = scmp.ne.s32.totalorder %s187, %s201
      %p203 = scmp.eq.s32.totalorder %s30, 0
      %p204 = por %p202, %p203
      %s206 = sadd.s32 %s205, 1
      %p209 = scmp.eq.s32.totalorder %s24, 1
      %p210 = scmp.ne.s32.totalorder %s205, %s207
      %p211 = scmp.eq.s32.totalorder %s24, 0
      %p212 = por %p210, %p211
      %p213 = scmp.ne.s32.totalorder %s205, %s207
      %p214 = scmp.eq.s32.totalorder %s29, 1
      %p215 = por %p213, %p214
      %p216 = scmp.ne.s32.totalorder %s207, %s208
      %p217 = scmp.eq.s32.totalorder %s29, 0
      %p218 = por %p216, %p217
      %p219 = scmp.ne.s32.totalorder %s207, %s208
      %p220 = scmp.eq.s32.totalorder %s30, 1
      %p221 = por %p219, %p220
      %p223 = scmp.ne.s32.totalorder %s208, %s222
      %p224 = scmp.eq.s32.totalorder %s30, 0
      %p225 = por %p223, %p224
      %s227 = sadd.s32 %s226, 1
      %p230 = scmp.eq.s32.totalorder %s24, 1
      %p231 = scmp.ne.s32.totalorder %s226, %s228
      %p232 = scmp.eq.s32.totalorder %s24, 0
      %p233 = por %p231, %p232
      %p234 = scmp.ne.s32.totalorder %s226, %s228
      %p235 = scmp.eq.s32.totalorder %s29, 1
      %p236 = por %p234, %p235
      %p237 = scmp.ne.s32.totalorder %s228, %s229
      %p238 = scmp.eq.s32.totalorder %s29, 0
      %p239 = por %p237, %p238
      %p240 = scmp.ne.s32.totalorder %s228, %s229
      %p241 = scmp.eq.s32.totalorder %s30, 1
      %p242 = por %p240, %p241
      %p244 = scmp.ne.s32.totalorder %s229, %s243
      %p245 = scmp.eq.s32.totalorder %s30, 0
      %p246 = por %p244, %p245
      %s248 = sadd.s32 %s247, 1
      %p251 = scmp.eq.s32.totalorder %s24, 1
      %p252 = scmp.ne.s32.totalorder %s247, %s249
      %p253 = scmp.eq.s32.totalorder %s24, 0
      %p254 = por %p252, %p253
      %p255 = scmp.ne.s32.totalorder %s247, %s249
      %p256 = scmp.eq.s32.totalorder %s29, 1
      %p257 = por %p255, %p256
      %p258 = scmp.ne.s32.totalorder %s249, %s250
      %p259 = scmp.eq.s32.totalorder %s29, 0
      %p260 = por %p258, %p259
      %p261 = scmp.ne.s32.totalorder %s249, %s250
      %p262 = scmp.eq.s32.totalorder %s30, 1
      %p263 = por %p261, %p262
      %p265 = scmp.ne.s32.totalorder %s250, %s264
      %p266 = scmp.eq.s32.totalorder %s30, 0
      %p267 = por %p265, %p266
      %s268 = ssub.s32 %s24, %s31
      %p269 = scmp.eq.s32.totalorder %s268, 0
      %s271 = sadd.s32 %s270, 1
      %s272 = scalar_select %p269, %s270, %s271
      %p275 = pneg %p269
      %p276 = scmp.eq.s32.totalorder %s24, 1
      %p277 = por %p275, %p276
      %p278 = scmp.ne.s32.totalorder %s270, %s273
      %p279 = scmp.eq.s32.totalorder %s24, 0
      %p280 = por %p278, %p279
      %p281 = scmp.ne.s32.totalorder %s270, %s273
      %p282 = scmp.eq.s32.totalorder %s29, 1
      %p283 = por %p281, %p282
      %p284 = scmp.ne.s32.totalorder %s273, %s274
      %p285 = scmp.eq.s32.totalorder %s29, 0
      %p286 = por %p284, %p285
      %p287 = scmp.ne.s32.totalorder %s273, %s274
      %p288 = scmp.eq.s32.totalorder %s30, 1
      %p289 = por %p287, %p288
      %p291 = scmp.ne.s32.totalorder %s274, %s290
      %p292 = scmp.eq.s32.totalorder %s30, 0
      %p293 = por %p291, %p292
      %p294 = scmp.le.s32.totalorder 1, %s24
      %p295 = scmp.lt.s32.totalorder %s24, 3
      %p296 = pnand %p294, %p295
      %p297 = pneg %p296
      // Predicated region
      $region9: #{tpu_custom_call.1} parent=5 // pred_check
        _
      $region10: #{tpu_custom_call.1} parent=5 // pred_check_branch
        %299 = sbr.rel (%p296) target = $region12
      $region11: #{tpu_custom_call.1} parent=5 // pred_region
        %s300 = ssub.s32 %s24, 1
        // Predicated region
        $region13: #{tpu_custom_call.1} parent=11 // pred_check
          %p301 = pneg %p71
        $region14: #{tpu_custom_call.1} parent=11 // pred_check_branch
          %303 = sbr.rel (%p301) target = $region16
        $region15: #{tpu_custom_call.1} parent=11 // pred_region
          %s305 = ssub.s32 16, 16
          %306 = vsyncadd [#allocation3], %s305
          %s308 = sshll.u32 [#allocation2], 4
          %s309 = int_to_ptr.vmem [resolvable:$true] %s308
          %311 = dma.hbm_to_vmem [thread:$0]  %s1, 16, %s309, [#allocation3]
        $region16: #{tpu_custom_call.1} parent=11 // pred_fallthru
          _
        // Predicated region
        $region17: #{tpu_custom_call.1} parent=11 // pred_check
          %p312 = pneg %p92
        $region18: #{tpu_custom_call.1} parent=11 // pred_check_branch
          %314 = sbr.rel (%p312) target = $region20
        $region19: #{tpu_custom_call.1} parent=11 // pred_region
          %s316 = ssub.s32 16, 16
          %317 = vsyncadd [#allocation6], %s316
          %s319 = sshll.u32 [#allocation5], 4
          %s320 = int_to_ptr.vmem [resolvable:$true] %s319
          %322 = dma.hbm_to_vmem [thread:$0]  %s2, 16, %s320, [#allocation6]
        $region20: #{tpu_custom_call.1} parent=11 // pred_fallthru
          _
        // Predicated region
        $region21: #{tpu_custom_call.1} parent=11 // pred_check
          %p323 = pneg %p113
        $region22: #{tpu_custom_call.1} parent=11 // pred_check_branch
          %325 = sbr.rel (%p323) target = $region24
        $region23: #{tpu_custom_call.1} parent=11 // pred_region
          _
        $region24: #{tpu_custom_call.1} parent=11 // pred_fallthru
          _
        // Predicated region
        $region25: #{tpu_custom_call.1} parent=11 // pred_check
          %p326 = pneg %p134
        $region26: #{tpu_custom_call.1} parent=11 // pred_check_branch
          %328 = sbr.rel (%p326) target = $region28
        $region27: #{tpu_custom_call.1} parent=11 // pred_region
          %s330 = ssub.s32 48, 48
          %331 = vsyncadd [#allocation6], %s330
          %s333 = sshll.u32 [#allocation7], 4
          %s334 = int_to_ptr.vmem [resolvable:$true] %s333
          %336 = dma.hbm_to_vmem [thread:$0]  %s4, 48, %s334, [#allocation6]
        $region28: #{tpu_custom_call.1} parent=11 // pred_fallthru
          _
        // Predicated region
        $region29: #{tpu_custom_call.1} parent=11 // pred_check
          %p337 = pneg %p155
        $region30: #{tpu_custom_call.1} parent=11 // pred_check_branch
          %339 = sbr.rel (%p337) target = $region32
        $region31: #{tpu_custom_call.1} parent=11 // pred_region
          %s341 = ssub.s32 16, 16
          %342 = vsyncadd [#allocation9], %s341
          %s344 = sshll.u32 [#allocation8], 4
          %s345 = int_to_ptr.vmem [resolvable:$true] %s344
          %347 = dma.hbm_to_vmem [thread:$0]  %s5, 16, %s345, [#allocation9]
        $region32: #{tpu_custom_call.1} parent=11 // pred_fallthru
          _
        // Predicated region
        $region33: #{tpu_custom_call.1} parent=11 // pred_check
          %p348 = pneg %p176
        $region34: #{tpu_custom_call.1} parent=11 // pred_check_branch
          %350 = sbr.rel (%p348) target = $region36
        $region35: #{tpu_custom_call.1} parent=11 // pred_region
          %s352 = ssub.s32 16, 16
          %353 = vsyncadd [#allocation9], %s352
          %s355 = sshll.u32 [#allocation10], 4
          %s356 = int_to_ptr.vmem [resolvable:$true] %s355
          %358 = dma.hbm_to_vmem [thread:$0]  %s6, 16, %s356, [#allocation9]
        $region36: #{tpu_custom_call.1} parent=11 // pred_fallthru
          _
        // Predicated region
        $region37: #{tpu_custom_call.1} parent=11 // pred_check
          %p359 = pneg %p197
        $region38: #{tpu_custom_call.1} parent=11 // pred_check_branch
          %361 = sbr.rel (%p359) target = $region40
        $region39: #{tpu_custom_call.1} parent=11 // pred_region
          _
        $region40: #{tpu_custom_call.1} parent=11 // pred_fallthru
          _
        // Predicated region
        $region41: #{tpu_custom_call.1} parent=11 // pred_check
          %p362 = pneg %p218
        $region42: #{tpu_custom_call.1} parent=11 // pred_check_branch
          %364 = sbr.rel (%p362) target = $region44
        $region43: #{tpu_custom_call.1} parent=11 // pred_region
          %s366 = ssub.s32 16, 16
          %367 = vsyncadd [#allocation12], %s366
          %s369 = sshll.u32 [#allocation11], 4
          %s370 = int_to_ptr.vmem [resolvable:$true] %s369
          %372 = dma.hbm_to_vmem [thread:$0]  %s8, 16, %s370, [#allocation12]
        $region44: #{tpu_custom_call.1} parent=11 // pred_fallthru
          _
        // Predicated region
        $region45: #{tpu_custom_call.1} parent=11 // pred_check
          %p373 = pneg %p239
        $region46: #{tpu_custom_call.1} parent=11 // pred_check_branch
          %375 = sbr.rel (%p373) target = $region48
        $region47: #{tpu_custom_call.1} parent=11 // pred_region
          _
        $region48: #{tpu_custom_call.1} parent=11 // pred_fallthru
          _
        // Predicated region
        $region49: #{tpu_custom_call.1} parent=11 // pred_check
          %p376 = pneg %p260
        $region50: #{tpu_custom_call.1} parent=11 // pred_check_branch
          %378 = sbr.rel (%p376) target = $region52
        $region51: #{tpu_custom_call.1} parent=11 // pred_region
          _
        $region52: #{tpu_custom_call.1} parent=11 // pred_fallthru
          _
      $region12: #{tpu_custom_call.1} parent=5 // pred_fallthru
        _
      %p379 = scmp.lt.s32.totalorder %s24, 2
      // Predicated region
      $region53: #{tpu_custom_call.1} parent=5 // pred_check
        %p380 = pneg %p379
      $region54: #{tpu_custom_call.1} parent=5 // pred_check_branch
        %382 = sbr.rel (%p380) target = $region56
      $region55: #{tpu_custom_call.1} parent=5 // pred_region
        // Predicated region
        $region57: #{tpu_custom_call.1} parent=55 // pred_check
          %p383 = pneg %p44
        $region58: #{tpu_custom_call.1} parent=55 // pred_check_branch
          %385 = sbr.rel (%p383) target = $region60
        $region59: #{tpu_custom_call.1} parent=55 // pred_region
          %p386 = scmp.lt.s32.totalorder %s24, 1
          %s387 = scalar_select %p386, %s24, 1
          %s388 = smul.addr %s387, 8
          %s389 = scalar_lea.vmem %s0, %s388
        $region60: #{tpu_custom_call.1} parent=55 // pred_fallthru
          _
      $region56: #{tpu_custom_call.1} parent=5 // pred_fallthru
        _
      %p390 = scmp.le.s32.totalorder 1, %s24
      %p391 = scmp.lt.s32.totalorder %s24, 3
      %p392 = pnand %p390, %p391
      %p393 = pneg %p392
      // Predicated region
      $region61: #{tpu_custom_call.1} parent=5 // pred_check
        _
      $region62: #{tpu_custom_call.1} parent=5 // pred_check_branch
        %395 = sbr.rel (%p392) target = $region64
      $region63: #{tpu_custom_call.1} parent=5 // pred_region
        %s396 = ssub.s32 %s24, 1
        // Predicated region
        $region65: #{tpu_custom_call.1} parent=63 // pred_check
          %p397 = pneg %p71
        $region66: #{tpu_custom_call.1} parent=63 // pred_check_branch
          %399 = sbr.rel (%p397) target = $region68
        $region67: #{tpu_custom_call.1} parent=63 // pred_region
          %400 = dma.done [#allocation3], 16
        $region68: #{tpu_custom_call.1} parent=63 // pred_fallthru
          _
        // Predicated region
        $region69: #{tpu_custom_call.1} parent=63 // pred_check
          %p401 = pneg %p92
        $region70: #{tpu_custom_call.1} parent=63 // pred_check_branch
          %403 = sbr.rel (%p401) target = $region72
        $region71: #{tpu_custom_call.1} parent=63 // pred_region
          %404 = dma.done [#allocation6], 16
        $region72: #{tpu_custom_call.1} parent=63 // pred_fallthru
          _
        // Predicated region
        $region73: #{tpu_custom_call.1} parent=63 // pred_check
          %p405 = pneg %p134
        $region74: #{tpu_custom_call.1} parent=63 // pred_check_branch
          %407 = sbr.rel (%p405) target = $region76
        $region75: #{tpu_custom_call.1} parent=63 // pred_region
          %408 = dma.done [#allocation6], 48
        $region76: #{tpu_custom_call.1} parent=63 // pred_fallthru
          _
        // Predicated region
        $region77: #{tpu_custom_call.1} parent=63 // pred_check
          %p409 = pneg %p155
        $region78: #{tpu_custom_call.1} parent=63 // pred_check_branch
          %411 = sbr.rel (%p409) target = $region80
        $region79: #{tpu_custom_call.1} parent=63 // pred_region
          %412 = dma.done [#allocation9], 16
        $region80: #{tpu_custom_call.1} parent=63 // pred_fallthru
          _
        // Predicated region
        $region81: #{tpu_custom_call.1} parent=63 // pred_check
          %p413 = pneg %p176
        $region82: #{tpu_custom_call.1} parent=63 // pred_check_branch
          %415 = sbr.rel (%p413) target = $region84
        $region83: #{tpu_custom_call.1} parent=63 // pred_region
          %416 = dma.done [#allocation9], 16
        $region84: #{tpu_custom_call.1} parent=63 // pred_fallthru
          _
        // Predicated region
        $region85: #{tpu_custom_call.1} parent=63 // pred_check
          %p417 = pneg %p218
        $region86: #{tpu_custom_call.1} parent=63 // pred_check_branch
          %419 = sbr.rel (%p417) target = $region88
        $region87: #{tpu_custom_call.1} parent=63 // pred_region
          %420 = dma.done [#allocation12], 16
        $region88: #{tpu_custom_call.1} parent=63 // pred_fallthru
          _
        %p421 = scmp.lt.s32.totalorder %s29, 1
        %s422 = scalar_select %p421, %s29, 1
        %s423 = smul.addr %s422, 8
        %s424 = scalar_lea.vmem %s0, %s423
        %p425 = pneg %p50
        %p426 = pneg %p47
        %p427 = pneg %p71
        %p428 = pneg %p68
        %p429 = pneg %p92
        %p430 = pneg %p89
        %p431 = pneg %p113
        %p432 = pneg %p110
        %p433 = pneg %p134
        %p434 = pneg %p131
        %p435 = pneg %p155
        %p436 = pneg %p152
        %p437 = pneg %p176
        %p438 = pneg %p173
        %p439 = pneg %p197
        %p440 = pneg %p194
        %p441 = pneg %p218
        %p442 = pneg %p215
        %p443 = pneg %p239
        %p444 = pneg %p236
        %p445 = pneg %p260
        %p446 = pneg %p257
        %p447 = pneg %p286
        %p448 = pneg %p283
        %s449 = sand.u32 %s273, 1
        %s450 = scalar_lea.sflag [#allocation4], %s449
        %s451 = sand.u32 %s273, 1
        %s452 = smul.addr %s451, 8
        %s453 = scalar_lea.vmem [#allocation13], %s452
        %p454 = scmp.lt.s32.totalorder %s29, 1
        %s455 = scalar_select %p454, %s29, 1
        %s456 = smul.addr %s455, 8
        %s457 = scalar_lea.vmem %s0, %s456
        %v459 = vld [vmem:[%s457] sm:$0xff]
        %v460 = vld [vmem:[#allocation2] sm:$0x1]
        %v461 = vld [vmem:[#allocation5] sm:$0x1]
        %vm462 = vcmask 261120
        %v463 = vsel %vm462, %v459, 0.0
        %464 = vadd.xlane.f32.xlu0 %v463
        %v465 = vpop.xlane.xlu0 %464
        %v466 = vrcp.pop 32.0
        %v467 = vmul.f32 %v465, %v466
        %v468 = vsub.f32 %v459, %v467
        %v469 = vmul.f32 %v468, %v468
        %v470 = vsel %vm462, %v469, 0.0
        %471 = vadd.xlane.f32.xlu0 %v470
        %v472 = vpop.xlane.xlu0 %471
        %v473 = vmul.f32 %v472, %v466
        %v474 = vadd.f32 %v473, 1e-05
        %v475 = vrsqrt.pop %v474
        %v476 = vmul.f32 %v468, %v475
        %v478 = vlaneseq
        %v479 = vshrl.u32 %v478, 7
        %v480 = vsub.s32 0, %v479
        %v481 = vrot.slane %v460, %v480
        %v483 = vmul.f32 %v476, %v481
        %v485 = vlaneseq
        %v486 = vshrl.u32 %v485, 7
        %v487 = vsub.s32 0, %v486
        %v488 = vrot.slane %v461, %v487
        %v490 = vadd.f32 %v483, %v488
        %v491 = vpack.c.bf16 %v490, %v490
        %v492 = vld [vmem:[%s3] sm:$0xff]
        %v493 = vld [vmem:[%s3 + $0x8] sm:$0xf]
        %v494 = vld [vmem:[%s3 + $0xc] sm:$0xff]
        %v495 = vld [vmem:[%s3 + $0x14] sm:$0xf]
        %v496 = vld [vmem:[%s3 + $0x18] sm:$0xff]
        %v497 = vld [vmem:[%s3 + $0x20] sm:$0xf]
        %v498 = vld [vmem:[%s3 + $0x24] sm:$0xff]
        %v499 = vld [vmem:[%s3 + $0x2c] sm:$0xf]
        %v500 = vld [vmem:[#allocation7] sm:$0x7]
        %v502 = vlaneseq
        %v503 = vshrl.u32 %v502, 7
        %v504 = vsub.s32 0, %v503
        %v505 = vrot.slane %v500, %v504
        %v506 = vlaneseq
        %v507 = vshrl.u32 %v506, 7
        %v508 = vsub.s32 1, %v507
        %v509 = vrot.slane %v500, %v508
        %v510 = vlaneseq
        %v511 = vshrl.u32 %v510, 7
        %v512 = vsub.s32 2, %v511
        %v513 = vrot.slane %v500, %v512
        %v525 = vunpack.c.l.b16 %v492
        %v526 = vunpack.c.h.b16 %v492
        %v527 = vunpack.c.l.b16 %v493
        %v528 = vunpack.c.l.b16 %v494
        %v529 = vunpack.c.h.b16 %v494
        %v530 = vunpack.c.l.b16 %v495
        %v531 = vunpack.c.l.b16 %v496
        %v532 = vunpack.c.h.b16 %v496
        %v533 = vunpack.c.l.b16 %v497
        %v534 = vunpack.c.l.b16 %v498
        %v535 = vunpack.c.h.b16 %v498
        %v536 = vunpack.c.l.b16 %v499
        %v537 = vpack.c.b16 %v528, %v525
        %v538 = vpack.c.b16 %v529, %v526
        %v539 = vpack.c.b16 %v530, %v527
        %v540 = vpack.c.b16 %v534, %v531
        %v541 = vpack.c.b16 %v535, %v532
        %v542 = vpack.c.b16 %v536, %v533
        %v550 = vsel %vm462, %v491, 0
        %552 = vmatprep.subr.bf16.mxu0 0
        %553 = vmatpush1.bf16.msra.mxu0 0
        %554 = vmatprep.subr.bf16.mxu0 0
        %555 = vmatpush1.bf16.msra.mxu0 0
        %556 = vmatprep.subr.bf16.mxu0 0
        %557 = vmatpush1.bf16.msra.mxu0 0
        %558 = vmatprep.subr.bf16.mxu0 0
        %559 = vmatpush1.bf16.msra.mxu0 0
        %560 = vmatprep.subr.bf16.mxu0 0
        %561 = vmatpush1.bf16.msra.mxu0 0
        %562 = vmatprep.subr.bf16.mxu0 0
        %563 = vmatpush1.bf16.msra.mxu0 0
        %564 = vmatprep.subr.bf16.mxu0 %v541
        %565 = vmatpush1.bf16.msra.mxu0 %v540
        %566 = vmatprep.subr.bf16.mxu0 %v538
        %567 = vmatpush1.bf16.msra.mxu0 %v537
        %568 = vmatprep.subr.bf16.mxu0 0
        %569 = vmatpush2.bf16.msra.mxu0 0
        %570 = vmatprep.subr.bf16.mxu0 0
        %571 = vmatpush2.bf16.msra.mxu0 0
        %572 = vmatprep.subr.bf16.mxu0 0
        %573 = vmatpush2.bf16.msra.mxu0 0
        %574 = vmatprep.subr.bf16.mxu0 0
        %575 = vmatpush2.bf16.msra.mxu0 0
        %576 = vmatprep.subr.bf16.mxu0 0
        %577 = vmatpush2.bf16.msra.mxu0 0
        %578 = vmatprep.subr.bf16.mxu0 0
        %579 = vmatpush2.bf16.msra.mxu0 0
        %580 = vmatprep.subr.bf16.mxu0 0
        %581 = vmatpush2.bf16.msra.mxu0 0
        %582 = vmatprep.subr.bf16.mxu0 0
        %583 = vmatpush2.bf16.msra.mxu0 0
        %584 = vmatprep.mubr.bf16.mxu0 0
        %585 = vmatmul.mubr.bf16.gmra.mxu0 %v550
        %v586 = vpop.f32.mrf.mxu0
        %v587 = vadd.f32 %v505, %v586
        %v588 = vpop.f32.mrf.mxu0
        %v589 = vadd.f32 %v509, %v588
        %v590 = vpop.f32.mrf.mxu0
        %v591 = vpop.f32.mrf.mxu0
        %592 = vdwg.mxu0
        %593 = vmatprep.subr.bf16.mxu0 0
        %594 = vmatpush1.bf16.msra.mxu0 0
        %595 = vmatprep.subr.bf16.mxu0 0
        %596 = vmatpush1.bf16.msra.mxu0 0
        %597 = vmatprep.subr.bf16.mxu0 0
        %598 = vmatpush1.bf16.msra.mxu0 0
        %599 = vmatprep.subr.bf16.mxu0 0
        %600 = vmatpush1.bf16.msra.mxu0 0
        %601 = vmatprep.subr.bf16.mxu0 0
        %602 = vmatpush1.bf16.msra.mxu0 0
        %603 = vmatprep.subr.bf16.mxu0 0
        %604 = vmatpush1.bf16.msra.mxu0 0
        %605 = vmatprep.subr.bf16.mxu0 0
        %606 = vmatpush1.bf16.msra.mxu0 %v542
        %607 = vmatprep.subr.bf16.mxu0 0
        %608 = vmatpush1.bf16.msra.mxu0 %v539
        %609 = vmatprep.subr.bf16.mxu0 0
        %610 = vmatpush2.bf16.msra.mxu0 0
        %611 = vmatprep.subr.bf16.mxu0 0
        %612 = vmatpush2.bf16.msra.mxu0 0
        %613 = vmatprep.subr.bf16.mxu0 0
        %614 = vmatpush2.bf16.msra.mxu0 0
        %615 = vmatprep.subr.bf16.mxu0 0
        %616 = vmatpush2.bf16.msra.mxu0 0
        %617 = vmatprep.subr.bf16.mxu0 0
        %618 = vmatpush2.bf16.msra.mxu0 0
        %619 = vmatprep.subr.bf16.mxu0 0
        %620 = vmatpush2.bf16.msra.mxu0 0
        %621 = vmatprep.subr.bf16.mxu0 0
        %622 = vmatpush2.bf16.msra.mxu0 0
        %623 = vmatprep.subr.bf16.mxu0 0
        %624 = vmatpush2.bf16.msra.mxu0 0
        %625 = vmatprep.mubr.bf16.mxu0 0
        %626 = vmatmul.mubr.bf16.gmra.mxu0 %v550
        %v627 = vpop.f32.mrf.mxu0
        %v628 = vadd.f32 %v513, %v627
        %v629 = vpop.f32.mrf.mxu0
        %v630 = vpop.f32.mrf.mxu0
        %v631 = vpop.f32.mrf.mxu0
        %632 = vdwg.mxu0
        %v633 = vpack.c.bf16 %v587, %v587
        %v634 = vpack.c.bf16 %v589, %v589
        %v635 = vpack.c.bf16 %v628, %v628
        %636 = vmatprep.subr.bf16.mxu0 0
        %637 = vmatpush1.bf16.xpose.msra.mxu0 0
        %638 = vmatprep.subr.bf16.mxu0 0
        %639 = vmatpush1.bf16.xpose.msra.mxu0 0
        %640 = vmatprep.subr.bf16.mxu0 0
        %641 = vmatpush1.bf16.xpose.msra.mxu0 0
        %642 = vmatprep.subr.bf16.mxu0 0
        %643 = vmatpush1.bf16.xpose.msra.mxu0 0
        %644 = vmatprep.subr.bf16.mxu0 0
        %645 = vmatpush1.bf16.xpose.msra.mxu0 0
        %646 = vmatprep.subr.bf16.mxu0 0
        %647 = vmatpush1.bf16.xpose.msra.mxu0 0
        %648 = vmatprep.subr.bf16.mxu0 0
        %649 = vmatpush1.bf16.xpose.msra.mxu0 0
        %650 = vmatprep.subr.bf16.mxu0 0
        %651 = vmatpush1.bf16.xpose.msra.mxu0 %v634
        %652 = vmatprep.subr.bf16.mxu0 0
        %653 = vmatpush2.bf16.xpose.msra.mxu0 0
        %654 = vmatprep.subr.bf16.mxu0 0
        %655 = vmatpush2.bf16.xpose.msra.mxu0 0
        %656 = vmatprep.subr.bf16.mxu0 0
        %657 = vmatpush2.bf16.xpose.msra.mxu0 0
        %658 = vmatprep.subr.bf16.mxu0 0
        %659 = vmatpush2.bf16.xpose.msra.mxu0 0
        %660 = vmatprep.subr.bf16.mxu0 0
        %661 = vmatpush2.bf16.xpose.msra.mxu0 0
        %662 = vmatprep.subr.bf16.mxu0 0
        %663 = vmatpush2.bf16.xpose.msra.mxu0 0
        %664 = vmatprep.subr.bf16.mxu0 0
        %665 = vmatpush2.bf16.xpose.msra.mxu0 0
        %666 = vmatprep.subr.bf16.mxu0 0
        %667 = vmatpush2.bf16.xpose.msra.mxu0 0
        %668 = vmatprep.mubr.bf16.mxu0 0
        %669 = vmatmul.mubr.bf16.gmra.mxu0 %v633
        %v670 = vpop.f32.mrf.mxu0
        %v671 = vadd.f32 0.0, %v670
        %v672 = vpop.f32.mrf.mxu0
        %v673 = vpop.f32.mrf.mxu0
        %v674 = vpop.f32.mrf.mxu0
        %675 = vdwg.mxu0
        %vm676 = vcmask 64512
        %v677 = vsel %vm676, %v671, -inf
        %678 = vmax.xlane.f32.xlu0 %v677
        %v679 = vpop.xlane.xlu0 %678
        %v680 = vsub.f32 %v671, %v679
        %v681 = vmul.f32 %v680, 1.442695
        %v682 = vpow.pop %v681
        %v683 = vsel %vm676, %v682, 0.0
        %684 = vadd.xlane.f32.xlu0 %v683
        %v685 = vpop.xlane.xlu0 %684
        %v686 = vrcp.pop %v685
        %v687 = vmul.f32 %v682, %v686
        %v688 = vpack.c.bf16 %v687, %v687
        %v690 = vsel %vm676, %v688, 0
        %vm692 = vcmask 1043456
        %v694 = vsel %vm692, %v635, 0
        %696 = vmatprep.subr.bf16.mxu0 0
        %697 = vmatpush1.bf16.msra.mxu0 0
        %698 = vmatprep.subr.bf16.mxu0 0
        %699 = vmatpush1.bf16.msra.mxu0 0
        %700 = vmatprep.subr.bf16.mxu0 0
        %701 = vmatpush1.bf16.msra.mxu0 0
        %702 = vmatprep.subr.bf16.mxu0 0
        %703 = vmatpush1.bf16.msra.mxu0 0
        %704 = vmatprep.subr.bf16.mxu0 0
        %705 = vmatpush1.bf16.msra.mxu0 0
        %706 = vmatprep.subr.bf16.mxu0 0
        %707 = vmatpush1.bf16.msra.mxu0 0
        %708 = vmatprep.subr.bf16.mxu0 0
        %709 = vmatpush1.bf16.msra.mxu0 0
        %710 = vmatprep.subr.bf16.mxu0 0
        %711 = vmatpush1.bf16.msra.mxu0 %v694
        %712 = vmatprep.subr.bf16.mxu0 0
        %713 = vmatpush2.bf16.msra.mxu0 0
        %714 = vmatprep.subr.bf16.mxu0 0
        %715 = vmatpush2.bf16.msra.mxu0 0
        %716 = vmatprep.subr.bf16.mxu0 0
        %717 = vmatpush2.bf16.msra.mxu0 0
        %718 = vmatprep.subr.bf16.mxu0 0
        %719 = vmatpush2.bf16.msra.mxu0 0
        %720 = vmatprep.subr.bf16.mxu0 0
        %721 = vmatpush2.bf16.msra.mxu0 0
        %722 = vmatprep.subr.bf16.mxu0 0
        %723 = vmatpush2.bf16.msra.mxu0 0
        %724 = vmatprep.subr.bf16.mxu0 0
        %725 = vmatpush2.bf16.msra.mxu0 0
        %726 = vmatprep.subr.bf16.mxu0 0
        %727 = vmatpush2.bf16.msra.mxu0 0
        %728 = vmatprep.mubr.bf16.mxu0 0
        %729 = vmatmul.mubr.bf16.gmra.mxu0 %v690
        %v730 = vpop.f32.mrf.mxu0
        %v731 = vadd.f32 0.0, %v730
        %v732 = vpop.f32.mrf.mxu0
        %v733 = vpop.f32.mrf.mxu0
        %v734 = vpop.f32.mrf.mxu0
        %735 = vdwg.mxu0
        %v736 = vadd.f32 %v459, %v731
        %v737 = vld [vmem:[#allocation8] sm:$0x1]
        %v738 = vld [vmem:[#allocation10] sm:$0x1]
        %v739 = vsel %vm462, %v736, 0.0
        %740 = vadd.xlane.f32.xlu0 %v739
        %v741 = vpop.xlane.xlu0 %740
        %v742 = vmul.f32 %v741, %v466
        %v743 = vsub.f32 %v736, %v742
        %v744 = vmul.f32 %v743, %v743
        %v745 = vsel %vm462, %v744, 0.0
        %746 = vadd.xlane.f32.xlu0 %v745
        %v747 = vpop.xlane.xlu0 %746
        %v748 = vmul.f32 %v747, %v466
        %v749 = vadd.f32 %v748, 1e-05
        %v750 = vrsqrt.pop %v749
        %v751 = vmul.f32 %v743, %v750
        %v753 = vlaneseq
        %v754 = vshrl.u32 %v753, 7
        %v755 = vsub.s32 0, %v754
        %v756 = vrot.slane %v737, %v755
        %v758 = vmul.f32 %v751, %v756
        %v760 = vlaneseq
        %v761 = vshrl.u32 %v760, 7
        %v762 = vsub.s32 0, %v761
        %v763 = vrot.slane %v738, %v762
        %v765 = vadd.f32 %v758, %v763
        %v766 = vpack.c.bf16 %v765, %v765
        %v767 = vld [vmem:[%s7] sm:$0xf]
        %v768 = vld [vmem:[%s7 + $0x4] sm:$0xf]
        %v769 = vld [vmem:[%s7 + $0x8] sm:$0xf]
        %v770 = vld [vmem:[%s7 + $0xc] sm:$0xf]
        %v771 = vld [vmem:[#allocation11] sm:$0x1]
        %v773 = vlaneseq
        %v774 = vshrl.u32 %v773, 7
        %v775 = vsub.s32 0, %v774
        %v776 = vrot.slane %v771, %v775
        %v782 = vunpack.c.l.b16 %v767
        %v783 = vunpack.c.l.b16 %v768
        %v784 = vunpack.c.l.b16 %v769
        %v785 = vunpack.c.l.b16 %v770
        %v786 = vpack.c.b16 %v783, %v782
        %v787 = vpack.c.b16 %v785, %v784
        %v791 = vsel %vm462, %v766, 0
        %793 = vmatprep.subr.bf16.mxu0 0
        %794 = vmatpush1.bf16.msra.mxu0 0
        %795 = vmatprep.subr.bf16.mxu0 0
        %796 = vmatpush1.bf16.msra.mxu0 0
        %797 = vmatprep.subr.bf16.mxu0 0
        %798 = vmatpush1.bf16.msra.mxu0 0
        %799 = vmatprep.subr.bf16.mxu0 0
        %800 = vmatpush1.bf16.msra.mxu0 0
        %801 = vmatprep.subr.bf16.mxu0 0
        %802 = vmatpush1.bf16.msra.mxu0 0
        %803 = vmatprep.subr.bf16.mxu0 0
        %804 = vmatpush1.bf16.msra.mxu0 0
        %805 = vmatprep.subr.bf16.mxu0 0
        %806 = vmatpush1.bf16.msra.mxu0 %v787
        %807 = vmatprep.subr.bf16.mxu0 0
        %808 = vmatpush1.bf16.msra.mxu0 %v786
        %809 = vmatprep.subr.bf16.mxu0 0
        %810 = vmatpush2.bf16.msra.mxu0 0
        %811 = vmatprep.subr.bf16.mxu0 0
        %812 = vmatpush2.bf16.msra.mxu0 0
        %813 = vmatprep.subr.bf16.mxu0 0
        %814 = vmatpush2.bf16.msra.mxu0 0
        %815 = vmatprep.subr.bf16.mxu0 0
        %816 = vmatpush2.bf16.msra.mxu0 0
        %817 = vmatprep.subr.bf16.mxu0 0
        %818 = vmatpush2.bf16.msra.mxu0 0
        %819 = vmatprep.subr.bf16.mxu0 0
        %820 = vmatpush2.bf16.msra.mxu0 0
        %821 = vmatprep.subr.bf16.mxu0 0
        %822 = vmatpush2.bf16.msra.mxu0 0
        %823 = vmatprep.subr.bf16.mxu0 0
        %824 = vmatpush2.bf16.msra.mxu0 0
        %825 = vmatprep.mubr.bf16.mxu0 0
        %826 = vmatmul.mubr.bf16.gmra.mxu0 %v791
        %v827 = vpop.f32.mrf.mxu0
        %v828 = vadd.f32 %v776, %v827
        %v829 = vpop.f32.mrf.mxu0
        %v830 = vpop.f32.mrf.mxu0
        %v831 = vpop.f32.mrf.mxu0
        %832 = vdwg.mxu0
        %v833 = vpack.c.bf16 %v828, %v828
        %v834 = vmax.bf16 %v833, 0
        %v835 = vld [vmem:[%s9] sm:$0xf]
        %v836 = vld [vmem:[%s9 + $0x4] sm:$0xf]
        %v837 = vld [vmem:[%s9 + $0x8] sm:$0xf]
        %v838 = vld [vmem:[%s9 + $0xc] sm:$0xf]
        %v839 = vld [vmem:[%s9 + $0x10] sm:$0xf]
        %v840 = vld [vmem:[%s9 + $0x14] sm:$0xf]
        %v841 = vld [vmem:[%s9 + $0x18] sm:$0xf]
        %v842 = vld [vmem:[%s9 + $0x1c] sm:$0xf]
        %v843 = vld [vmem:[%s9 + $0x20] sm:$0xf]
        %v844 = vld [vmem:[%s9 + $0x24] sm:$0xf]
        %v845 = vld [vmem:[%s9 + $0x28] sm:$0xf]
        %v846 = vld [vmem:[%s9 + $0x2c] sm:$0xf]
        %v847 = vld [vmem:[%s9 + $0x30] sm:$0xf]
        %v848 = vld [vmem:[%s9 + $0x34] sm:$0xf]
        %v849 = vld [vmem:[%s9 + $0x38] sm:$0xf]
        %v850 = vld [vmem:[%s9 + $0x3c] sm:$0xf]
        %v851 = vld [vmem:[%s10] sm:$0x1]
        %v853 = vlaneseq
        %v854 = vshrl.u32 %v853, 7
        %v855 = vsub.s32 0, %v854
        %v856 = vrot.slane %v851, %v855
        %v874 = vunpack.c.l.b16 %v835
        %v875 = vunpack.c.l.b16 %v836
        %v876 = vunpack.c.l.b16 %v837
        %v877 = vunpack.c.l.b16 %v838
        %v878 = vunpack.c.l.b16 %v839
        %v879 = vunpack.c.l.b16 %v840
        %v880 = vunpack.c.l.b16 %v841
        %v881 = vunpack.c.l.b16 %v842
        %v882 = vunpack.c.l.b16 %v843
        %v883 = vunpack.c.l.b16 %v844
        %v884 = vunpack.c.l.b16 %v845
        %v885 = vunpack.c.l.b16 %v846
        %v886 = vunpack.c.l.b16 %v847
        %v887 = vunpack.c.l.b16 %v848
        %v888 = vunpack.c.l.b16 %v849
        %v889 = vunpack.c.l.b16 %v850
        %v890 = vpack.c.b16 %v875, %v874
        %v891 = vpack.c.b16 %v877, %v876
        %v892 = vpack.c.b16 %v879, %v878
        %v893 = vpack.c.b16 %v881, %v880
        %v894 = vpack.c.b16 %v883, %v882
        %v895 = vpack.c.b16 %v885, %v884
        %v896 = vpack.c.b16 %v887, %v886
        %v897 = vpack.c.b16 %v889, %v888
        %906 = vmatprep.subr.bf16.mxu0 0
        %907 = vmatpush1.bf16.msra.mxu0 %v897
        %908 = vmatprep.subr.bf16.mxu0 0
        %909 = vmatpush1.bf16.msra.mxu0 %v896
        %910 = vmatprep.subr.bf16.mxu0 0
        %911 = vmatpush1.bf16.msra.mxu0 %v895
        %912 = vmatprep.subr.bf16.mxu0 0
        %913 = vmatpush1.bf16.msra.mxu0 %v894
        %914 = vmatprep.subr.bf16.mxu0 0
        %915 = vmatpush1.bf16.msra.mxu0 %v893
        %916 = vmatprep.subr.bf16.mxu0 0
        %917 = vmatpush1.bf16.msra.mxu0 %v892
        %918 = vmatprep.subr.bf16.mxu0 0
        %919 = vmatpush1.bf16.msra.mxu0 %v891
        %920 = vmatprep.subr.bf16.mxu0 0
        %921 = vmatpush1.bf16.msra.mxu0 %v890
        %922 = vmatprep.subr.bf16.mxu0 0
        %923 = vmatpush2.bf16.msra.mxu0 0
        %924 = vmatprep.subr.bf16.mxu0 0
        %925 = vmatpush2.bf16.msra.mxu0 0
        %926 = vmatprep.subr.bf16.mxu0 0
        %927 = vmatpush2.bf16.msra.mxu0 0
        %928 = vmatprep.subr.bf16.mxu0 0
        %929 = vmatpush2.bf16.msra.mxu0 0
        %930 = vmatprep.subr.bf16.mxu0 0
        %931 = vmatpush2.bf16.msra.mxu0 0
        %932 = vmatprep.subr.bf16.mxu0 0
        %933 = vmatpush2.bf16.msra.mxu0 0
        %934 = vmatprep.subr.bf16.mxu0 0
        %935 = vmatpush2.bf16.msra.mxu0 0
        %936 = vmatprep.subr.bf16.mxu0 0
        %937 = vmatpush2.bf16.msra.mxu0 0
        %938 = vmatprep.mubr.bf16.mxu0 0
        %939 = vmatmul.mubr.bf16.gmra.mxu0 %v834
        %v940 = vpop.f32.mrf.mxu0
        %v941 = vadd.f32 %v856, %v940
        %v942 = vpop.f32.mrf.mxu0
        %v943 = vpop.f32.mrf.mxu0
        %v944 = vpop.f32.mrf.mxu0
        %945 = vdwg.mxu0
        %v946 = vadd.f32 %v736, %v941
        %947 = vst.msk [vmem:[%s453] sm:$0xff] %vm462, %v946
        %s948 = sand.u32 %s273, 1
        %s949 = scalar_lea.sflag [#allocation4], %s948
        %s950 = sand.u32 %s273, 1
        %s951 = smul.addr %s950, 8
        %s952 = scalar_lea.vmem [#allocation13], %s951
        // Predicated region
        $region89: #{tpu_custom_call.1} parent=63 // pred_check
          %p953 = pneg %p283
        $region90: #{tpu_custom_call.1} parent=63 // pred_check_branch
          %955 = sbr.rel (%p953) target = $region92
        $region91: #{tpu_custom_call.1} parent=63 // pred_region
          %s957 = ssub.s32 128, 128
          %958 = vsyncadd %s949, %s957
          %s959 = smul.addr %s29, 128
          %s960 = scalar_lea.hbm %s11, %s959
          %s962 = sshll.u32 %s952, 4
          %s963 = int_to_ptr.vmem [resolvable:$true] %s962
          %965 = dma.vmem_to_hbm [thread:$0]  %s963, 128, %s960, %s949
        $region92: #{tpu_custom_call.1} parent=63 // pred_fallthru
          _
      $region64: #{tpu_custom_call.1} parent=5 // pred_fallthru
        _
      %p966 = scmp.le.s32.totalorder 2, %s24
      // Predicated region
      $region93: #{tpu_custom_call.1} parent=5 // pred_check
        %p967 = pneg %p966
      $region94: #{tpu_custom_call.1} parent=5 // pred_check_branch
        %969 = sbr.rel (%p967) target = $region96
      $region95: #{tpu_custom_call.1} parent=5 // pred_region
        %s970 = ssub.s32 %s24, 2
        // Predicated region
        $region97: #{tpu_custom_call.1} parent=95 // pred_check
          %p971 = pneg %p289
        $region98: #{tpu_custom_call.1} parent=95 // pred_check_branch
          %973 = sbr.rel (%p971) target = $region100
        $region99: #{tpu_custom_call.1} parent=95 // pred_region
          %s974 = sand.u32 %s274, 1
          %s975 = scalar_lea.sflag [#allocation4], %s974
          %s976 = sand.u32 %s274, 1
          %s977 = smul.addr %s976, 8
          %s978 = scalar_lea.vmem [#allocation13], %s977
          %979 = dma.done %s975, 128
        $region100: #{tpu_custom_call.1} parent=95 // pred_fallthru
          _
      $region96: #{tpu_custom_call.1} parent=5 // pred_fallthru
        _
    $region6: #{tpu_custom_call.1} parent=1 // loop_footer
      %s28 = sadd.s32 1, %s24
    $region7: #{tpu_custom_call.1} parent=1 // loop_footer_branch
      %23 = sbr.rel target = $region3
    $region8: #{tpu_custom_call.1} parent=1 // loop_exit
      _
    %980 = vsyncpa [#allocation3], 1
    %s981 = scalar_lea.sflag [#allocation3], 1
    %982 = vsyncpa %s981, 1
    %983 = vsyncpa [#allocation6], 1
    %984 = vsyncpa [#allocation9], 1
    %985 = vsyncpa [#allocation12], 1
    %986 = vsyncpa [#allocation4], 1
    %s987 = scalar_lea.sflag [#allocation4], 1
    %988 = vsyncpa %s987, 1

// kernel: tpu_custom_call.1
$region0: #{tpu_custom_call.1}
  #allocation0 [shape = 'u32[]', space=smem, size = 0x4, offset = 0x4, fixed_abs, tag = 'smem constant byte address 0x4 - core index']
  #allocation1 [shape = 'u32[144,128]{1,0:T(1,128)}', space=vmem, size = 0x12000, scoped, tag = 'internal scratch']
  %s0 = inlined_call_operand.vmem [shape: f32[16,32], index: 0, kind: input, shape index: {}]
  %s1 = inlined_call_operand.hbm [shape: f32[1,32], index: 1, kind: input, shape index: {}]
  %s2 = inlined_call_operand.hbm [shape: f32[1,32], index: 2, kind: input, shape index: {}]
  %s3 = inlined_call_operand.vmem [shape: bf16[32,384], index: 3, kind: input, shape index: {}]
  %s4 = inlined_call_operand.hbm [shape: f32[1,384], index: 4, kind: input, shape index: {}]
  %s5 = inlined_call_operand.hbm [shape: f32[1,32], index: 5, kind: input, shape index: {}]
  %s6 = inlined_call_operand.hbm [shape: f32[1,32], index: 6, kind: input, shape index: {}]
  %s7 = inlined_call_operand.vmem [shape: bf16[32,128], index: 7, kind: input, shape index: {}]
  %s8 = inlined_call_operand.hbm [shape: f32[1,128], index: 8, kind: input, shape index: {}]
  %s9 = inlined_call_operand.vmem [shape: bf16[128,32], index: 9, kind: input, shape index: {}]
  %s10 = inlined_call_operand.vmem [shape: f32[1,32], index: 10, kind: input, shape index: {}]
  %s11 = inlined_call_operand.hbm [shape: f32[16,32], index: 11, kind: output, shape index: {}]
  %s12 = sld [smem:[#allocation0]]
  $region101: #{tpu_custom_call.1} parent=0
    _
  %s14 = ssub.s32 1, %s12
  %s15 = scalar_select 0, %s14, %s12
  $region1: #{tpu_custom_call.1} parent=0
    #allocation2 [shape = 'u8[512]{0}', space=vmem, size = 0x400, scoped, tag = 'input window, operand 1, single buffered']
    #allocation3 [shape = 's32[2]{0}', space=sflag, size = 0x8, scoped, tag = 'scoped memory for tpu_custom_call.1']
    #allocation4 [shape = 's32[2]{0}', space=sflag, size = 0x8, scoped, tag = 'scoped memory for tpu_custom_call.1']
    #allocation5 [shape = 'u8[512]{0}', space=vmem, size = 0x400, scoped, tag = 'input window, operand 2, single buffered']
    #allocation6 [shape = 's32[1]{0}', space=sflag, size = 0x4, scoped, tag = 'scoped memory for tpu_custom_call.1']
    #allocation7 [shape = 'u8[1536]{0}', space=vmem, size = 0x800, scoped, tag = 'input window, operand 4, single buffered']
    #allocation8 [shape = 'u8[512]{0}', space=vmem, size = 0x400, scoped, tag = 'input window, operand 5, single buffered']
    #allocation9 [shape = 's32[1]{0}', space=sflag, size = 0x4, scoped, tag = 'scoped memory for tpu_custom_call.1']
    #allocation10 [shape = 'u8[512]{0}', space=vmem, size = 0x400, scoped, tag = 'input window, operand 6, single buffered']
    #allocation11 [shape = 'u8[512]{0}', space=vmem, size = 0x400, scoped, tag = 'input window, operand 8, single buffered']
    #allocation12 [shape = 's32[1]{0}', space=sflag, size = 0x4, scoped, tag = 'scoped memory for tpu_custom_call.1']
    #allocation13 [shape = 'u8[8192]{0}', space=vmem, size = 0x2000, scoped, tag = 'output window, operand 0']
    %16 = vsyncpa [#allocation3], 0
    %17 = vsyncpa [#allocation6], 0
    %18 = vsyncpa [#allocation9], 0
    %19 = vsyncpa [#allocation12], 0
    %20 = vsyncpa [#allocation4], 0
    %s21 = scalar_lea.sflag [#allocation4], 1
    %22 = vsyncpa %s21, 0
    loop: start=0, step=1, limit=4
    $region2: #{tpu_custom_call.1} parent=1 // loop_pre_header
      _
    $region3: #{tpu_custom_call.1} parent=1 // loop_header
      %s24 = sphi 0, %s28
      %p25 = scmp.ge.s32.totalorder %s24, 4
      %s34 = sphi 0, %s36
      %s37 = sphi 0, %s34
      %s38 = sphi 0, %s37
      %s54 = sphi 0, %s38
      %s58 = sphi 0, %s58
      %s60 = sphi 0, %s58
      %s61 = sphi 0, %s60
      %s75 = sphi 0, %s61
      %s79 = sphi 0, %s79
      %s81 = sphi 0, %s79
      %s82 = sphi 0, %s81
      %s96 = sphi 0, %s82
      %s100 = sphi 0, %s100
      %s102 = sphi 0, %s100
      %s103 = sphi 0, %s102
      %s117 = sphi 0, %s103
      %s121 = sphi 0, %s121
      %s123 = sphi 0, %s121
      %s124 = sphi 0, %s123
      %s138 = sphi 0, %s124
      %s142 = sphi 0, %s142
      %s144 = sphi 0, %s142
      %s145 = sphi 0, %s144
      %s159 = sphi 0, %s145
      %s163 = sphi 0, %s163
      %s165 = sphi 0, %s163
      %s166 = sphi 0, %s165
      %s180 = sphi 0, %s166
      %s184 = sphi 0, %s184
      %s186 = sphi 0, %s184
      %s187 = sphi 0, %s186
      %s201 = sphi 0, %s187
      %s205 = sphi 0, %s205
      %s207 = sphi 0, %s205
      %s208 = sphi 0, %s207
      %s222 = sphi 0, %s208
      %s226 = sphi 0, %s226
      %s228 = sphi 0, %s226
      %s229 = sphi 0, %s228
      %s243 = sphi 0, %s229
      %s247 = sphi 0, %s247
      %s249 = sphi 0, %s247
      %s250 = sphi 0, %s249
      %s264 = sphi 0, %s250
      %s270 = sphi 0, %s272
      %s273 = sphi 0, %s270
      %s274 = sphi 0, %s273
      %s290 = sphi 0, %s274
    $region4: #{tpu_custom_call.1} parent=1 // loop_header_branch
      %27 = sbr.rel (%p25) target = $region8
    $region5: #{tpu_custom_call.1} parent=1 // loop_body
      %s29 = ssub.s32 %s24, 1
      %s30 = ssub.s32 %s24, 2
      %s31 = sadd.s32 %s24, 1
      %s32 = ssub.s32 %s24, %s31
      %p33 = scmp.eq.s32.totalorder %s32, 0
      %s35 = sadd.s32 %s34, 1
      %s36 = scalar_select %p33, %s34, %s35
      %p39 = pneg %p33
      %p40 = scmp.eq.s32.totalorder %s24, 1
      %p41 = por %p39, %p40
      %p42 = scmp.ne.s32.totalorder %s34, %s37
      %p43 = scmp.eq.s32.totalorder %s24, 0
      %p44 = por %p42, %p43
      %p45 = scmp.ne.s32.totalorder %s34, %s37
      %p46 = scmp.eq.s32.totalorder %s29, 1
      %p47 = por %p45, %p46
      %p48 = scmp.ne.s32.totalorder %s37, %s38
      %p49 = scmp.eq.s32.totalorder %s29, 0
      %p50 = por %p48, %p49
      %p51 = scmp.ne.s32.totalorder %s37, %s38
      %p52 = scmp.eq.s32.totalorder %s30, 1
      %p53 = por %p51, %p52
      %p55 = scmp.ne.s32.totalorder %s38, %s54
      %p56 = scmp.eq.s32.totalorder %s30, 0
      %p57 = por %p55, %p56
      %s59 = sadd.s32 %s58, 1
      %p62 = scmp.eq.s32.totalorder %s24, 1
      %p63 = scmp.ne.s32.totalorder %s58, %s60
      %p64 = scmp.eq.s32.totalorder %s24, 0
      %p65 = por %p63, %p64
      %p66 = scmp.ne.s32.totalorder %s58, %s60
      %p67 = scmp.eq.s32.totalorder %s29, 1
      %p68 = por %p66, %p67
      %p69 = scmp.ne.s32.totalorder %s60, %s61
      %p70 = scmp.eq.s32.totalorder %s29, 0
      %p71 = por %p69, %p70
      %p72 = scmp.ne.s32.totalorder %s60, %s61
      %p73 = scmp.eq.s32.totalorder %s30, 1
      %p74 = por %p72, %p73
      %p76 = scmp.ne.s32.totalorder %s61, %s75
      %p77 = scmp.eq.s32.totalorder %s30, 0
      %p78 = por %p76, %p77
      %s80 = sadd.s32 %s79, 1
      %p83 = scmp.eq.s32.totalorder %s24, 1
      %p84 = scmp.ne.s32.totalorder %s79, %s81
      %p85 = scmp.eq.s32.totalorder %s24, 0
      %p86 = por %p84, %p85
      %p87 = scmp.ne.s32.totalorder %s79, %s81
      %p88 = scmp.eq.s32.totalorder %s29, 1
      %p89 = por %p87, %p88
      %p90 = scmp.ne.s32.totalorder %s81, %s82
      %p91 = scmp.eq.s32.totalorder %s29, 0
      %p92 = por %p90, %p91
      %p93 = scmp.ne.s32.totalorder %s81, %s82
      %p94 = scmp.eq.s32.totalorder %s30, 1
      %p95 = por %p93, %p94
      %p97 = scmp.ne.s32.totalorder %s82, %s96
      %p98 = scmp.eq.s32.totalorder %s30, 0
      %p99 = por %p97, %p98
      %s101 = sadd.s32 %s100, 1
      %p104 = scmp.eq.s32.totalorder %s24, 1
      %p105 = scmp.ne.s32.totalorder %s100, %s102
      %p106 = scmp.eq.s32.totalorder %s24, 0
      %p107 = por %p105, %p106
      %p108 = scmp.ne.s32.totalorder %s100, %s102
      %p109 = scmp.eq.s32.totalorder %s29, 1
      %p110 = por %p108, %p109
      %p111 = scmp.ne.s32.totalorder %s102, %s103
      %p112 = scmp.eq.s32.totalorder %s29, 0
      %p113 = por %p111, %p112
      %p114 = scmp.ne.s32.totalorder %s102, %s103
      %p115 = scmp.eq.s32.totalorder %s30, 1
      %p116 = por %p114, %p115
      %p118 = scmp.ne.s32.totalorder %s103, %s117
      %p119 = scmp.eq.s32.totalorder %s30, 0
      %p120 = por %p118, %p119
      %s122 = sadd.s32 %s121, 1
      %p125 = scmp.eq.s32.totalorder %s24, 1
      %p126 = scmp.ne.s32.totalorder %s121, %s123
      %p127 = scmp.eq.s32.totalorder %s24, 0
      %p128 = por %p126, %p127
      %p129 = scmp.ne.s32.totalorder %s121, %s123
      %p130 = scmp.eq.s32.totalorder %s29, 1
      %p131 = por %p129, %p130
      %p132 = scmp.ne.s32.totalorder %s123, %s124
      %p133 = scmp.eq.s32.totalorder %s29, 0
      %p134 = por %p132, %p133
      %p135 = scmp.ne.s32.totalorder %s123, %s124
      %p136 = scmp.eq.s32.totalorder %s30, 1
      %p137 = por %p135, %p136
      %p139 = scmp.ne.s32.totalorder %s124, %s138
      %p140 = scmp.eq.s32.totalorder %s30, 0
      %p141 = por %p139, %p140
      %s143 = sadd.s32 %s142, 1
      %p146 = scmp.eq.s32.totalorder %s24, 1
      %p147 = scmp.ne.s32.totalorder %s142, %s144
      %p148 = scmp.eq.s32.totalorder %s24, 0
      %p149 = por %p147, %p148
      %p150 = scmp.ne.s32.totalorder %s142, %s144
      %p151 = scmp.eq.s32.totalorder %s29, 1
      %p152 = por %p150, %p151
      %p153 = scmp.ne.s32.totalorder %s144, %s145
      %p154 = scmp.eq.s32.totalorder %s29, 0
      %p155 = por %p153, %p154
      %p156 = scmp.ne.s32.totalorder %s144, %s145
      %p157 = scmp.eq.s32.totalorder %s30, 1
      %p158 = por %p156, %p157
      %p160 = scmp.ne.s32.totalorder %s145, %s159
      %p161 = scmp.eq.s32.totalorder %s30, 0
      %p162 = por %p160, %p161
      %s164 = sadd.s32 %s163, 1
      %p167 = scmp.eq.s32.totalorder %s24, 1
      %p168 = scmp.ne.s32.totalorder %s163, %s165
      %p169 = scmp.eq.s32.totalorder %s24, 0
      %p170 = por %p168, %p169
      %p171 = scmp.ne.s32.totalorder %s163, %s165
      %p172 = scmp.eq.s32.totalorder %s29, 1
      %p173 = por %p171, %p172
      %p174 = scmp.ne.s32.totalorder %s165, %s166
      %p175 = scmp.eq.s32.totalorder %s29, 0
      %p176 = por %p174, %p175
      %p177 = scmp.ne.s32.totalorder %s165, %s166
      %p178 = scmp.eq.s32.totalorder %s30, 1
      %p179 = por %p177, %p178
      %p181 = scmp.ne.s32.totalorder %s166, %s180
      %p182 = scmp.eq.s32.totalorder %s30, 0
      %p183 = por %p181, %p182
      %s185 = sadd.s32 %s184, 1
      %p188 = scmp.eq.s32.totalorder %s24, 1
      %p189 = scmp.ne.s32.totalorder %s184, %s186
      %p190 = scmp.eq.s32.totalorder %s24, 0
      %p191 = por %p189, %p190
      %p192 = scmp.ne.s32.totalorder %s184, %s186
      %p193 = scmp.eq.s32.totalorder %s29, 1
      %p194 = por %p192, %p193
      %p195 = scmp.ne.s32.totalorder %s186, %s187
      %p196 = scmp.eq.s32.totalorder %s29, 0
      %p197 = por %p195, %p196
      %p198 = scmp.ne.s32.totalorder %s186, %s187
      %p199 = scmp.eq.s32.totalorder %s30, 1
      %p200 = por %p198, %p199
      %p202 = scmp.ne.s32.totalorder %s187, %s201
      %p203 = scmp.eq.s32.totalorder %s30, 0
      %p204 = por %p202, %p203
      %s206 = sadd.s32 %s205, 1
      %p209 = scmp.eq.s32.totalorder %s24, 1
      %p210 = scmp.ne.s32.totalorder %s205, %s207
      %p211 = scmp.eq.s32.totalorder %s24, 0
      %p212 = por %p210, %p211
      %p213 = scmp.ne.s32.totalorder %s205, %s207
      %p214 = scmp.eq.s32.totalorder %s29, 1
      %p215 = por %p213, %p214
      %p216 = scmp.ne.s32.totalorder %s207, %s208
      %p217 = scmp.eq.s32.totalorder %s29, 0
      %p218 = por %p216, %p217
      %p219 = scmp.ne.s32.totalorder %s207, %s208
      %p220 = scmp.eq.s32.totalorder %s30, 1
      %p221 = por %p219, %p220
      %p223 = scmp.ne.s32.totalorder %s208, %s222
      %p224 = scmp.eq.s32.totalorder %s30, 0
      %p225 = por %p223, %p224
      %s227 = sadd.s32 %s226, 1
      %p230 = scmp.eq.s32.totalorder %s24, 1
      %p231 = scmp.ne.s32.totalorder %s226, %s228
      %p232 = scmp.eq.s32.totalorder %s24, 0
      %p233 = por %p231, %p232
      %p234 = scmp.ne.s32.totalorder %s226, %s228
      %p235 = scmp.eq.s32.totalorder %s29, 1
      %p236 = por %p234, %p235
      %p237 = scmp.ne.s32.totalorder %s228, %s229
      %p238 = scmp.eq.s32.totalorder %s29, 0
      %p239 = por %p237, %p238
      %p240 = scmp.ne.s32.totalorder %s228, %s229
      %p241 = scmp.eq.s32.totalorder %s30, 1
      %p242 = por %p240, %p241
      %p244 = scmp.ne.s32.totalorder %s229, %s243
      %p245 = scmp.eq.s32.totalorder %s30, 0
      %p246 = por %p244, %p245
      %s248 = sadd.s32 %s247, 1
      %p251 = scmp.eq.s32.totalorder %s24, 1
      %p252 = scmp.ne.s32.totalorder %s247, %s249
      %p253 = scmp.eq.s32.totalorder %s24, 0
      %p254 = por %p252, %p253
      %p255 = scmp.ne.s32.totalorder %s247, %s249
      %p256 = scmp.eq.s32.totalorder %s29, 1
      %p257 = por %p255, %p256
      %p258 = scmp.ne.s32.totalorder %s249, %s250
      %p259 = scmp.eq.s32.totalorder %s29, 0
      %p260 = por %p258, %p259
      %p261 = scmp.ne.s32.totalorder %s249, %s250
      %p262 = scmp.eq.s32.totalorder %s30, 1
      %p263 = por %p261, %p262
      %p265 = scmp.ne.s32.totalorder %s250, %s264
      %p266 = scmp.eq.s32.totalorder %s30, 0
      %p267 = por %p265, %p266
      %s268 = ssub.s32 %s24, %s31
      %p269 = scmp.eq.s32.totalorder %s268, 0
      %s271 = sadd.s32 %s270, 1
      %s272 = scalar_select %p269, %s270, %s271
      %p275 = pneg %p269
      %p276 = scmp.eq.s32.totalorder %s24, 1
      %p277 = por %p275, %p276
      %p278 = scmp.ne.s32.totalorder %s270, %s273
      %p279 = scmp.eq.s32.totalorder %s24, 0
      %p280 = por %p278, %p279
      %p281 = scmp.ne.s32.totalorder %s270, %s273
      %p282 = scmp.eq.s32.totalorder %s29, 1
      %p283 = por %p281, %p282
      %p284 = scmp.ne.s32.totalorder %s273, %s274
      %p285 = scmp.eq.s32.totalorder %s29, 0
      %p286 = por %p284, %p285
      %p287 = scmp.ne.s32.totalorder %s273, %s274
      %p288 = scmp.eq.s32.totalorder %s30, 1
      %p289 = por %p287, %p288
      %p291 = scmp.ne.s32.totalorder %s274, %s290
      %p292 = scmp.eq.s32.totalorder %s30, 0
      %p293 = por %p291, %p292
      %p294 = scmp.le.s32.totalorder 1, %s24
      %p295 = scmp.lt.s32.totalorder %s24, 3
      %p296 = pnand %p294, %p295
      %p297 = pneg %p296
      // Predicated region
      $region9: #{tpu_custom_call.1} parent=5 // pred_check
        _
      $region10: #{tpu_custom_call.1} parent=5 // pred_check_branch
        %299 = sbr.rel (%p296) target = $region12
      $region11: #{tpu_custom_call.1} parent=5 // pred_region
        %s300 = ssub.s32 %s24, 1
        // Predicated region
        $region13: #{tpu_custom_call.1} parent=11 // pred_check
          %p301 = pneg %p71
        $region14: #{tpu_custom_call.1} parent=11 // pred_check_branch
          %303 = sbr.rel (%p301) target = $region16
        $region15: #{tpu_custom_call.1} parent=11 // pred_region
          %s305 = ssub.s32 16, 16
          %306 = vsyncadd [#allocation3], %s305
          %s308 = sshll.u32 [#allocation2], 4
          %s309 = int_to_ptr.vmem [resolvable:$true] %s308
          %311 = dma.hbm_to_vmem [thread:$0]  %s1, 16, %s309, [#allocation3]
        $region16: #{tpu_custom_call.1} parent=11 // pred_fallthru
          _
        // Predicated region
        $region17: #{tpu_custom_call.1} parent=11 // pred_check
          %p312 = pneg %p92
        $region18: #{tpu_custom_call.1} parent=11 // pred_check_branch
          %314 = sbr.rel (%p312) target = $region20
        $region19: #{tpu_custom_call.1} parent=11 // pred_region
          %s316 = ssub.s32 16, 16
          %317 = vsyncadd [#allocation6], %s316
          %s319 = sshll.u32 [#allocation5], 4
          %s320 = int_to_ptr.vmem [resolvable:$true] %s319
          %322 = dma.hbm_to_vmem [thread:$0]  %s2, 16, %s320, [#allocation6]
        $region20: #{tpu_custom_call.1} parent=11 // pred_fallthru
          _
        // Predicated region
        $region21: #{tpu_custom_call.1} parent=11 // pred_check
          %p323 = pneg %p113
        $region22: #{tpu_custom_call.1} parent=11 // pred_check_branch
          %325 = sbr.rel (%p323) target = $region24
        $region23: #{tpu_custom_call.1} parent=11 // pred_region
          _
        $region24: #{tpu_custom_call.1} parent=11 // pred_fallthru
          _
        // Predicated region
        $region25: #{tpu_custom_call.1} parent=11 // pred_check
          %p326 = pneg %p134
        $region26: #{tpu_custom_call.1} parent=11 // pred_check_branch
          %328 = sbr.rel (%p326) target = $region28
        $region27: #{tpu_custom_call.1} parent=11 // pred_region
          %s330 = ssub.s32 48, 48
          %331 = vsyncadd [#allocation6], %s330
          %s333 = sshll.u32 [#allocation7], 4
          %s334 = int_to_ptr.vmem [resolvable:$true] %s333
          %336 = dma.hbm_to_vmem [thread:$0]  %s4, 48, %s334, [#allocation6]
        $region28: #{tpu_custom_call.1} parent=11 // pred_fallthru
          _
        // Predicated region
        $region29: #{tpu_custom_call.1} parent=11 // pred_check
          %p337 = pneg %p155
        $region30: #{tpu_custom_call.1} parent=11 // pred_check_branch
          %339 = sbr.rel (%p337) target = $region32
        $region31: #{tpu_custom_call.1} parent=11 // pred_region
          %s341 = ssub.s32 16, 16
          %342 = vsyncadd [#allocation9], %s341
          %s344 = sshll.u32 [#allocation8], 4
          %s345 = int_to_ptr.vmem [resolvable:$true] %s344
          %347 = dma.hbm_to_vmem [thread:$0]  %s5, 16, %s345, [#allocation9]
        $region32: #{tpu_custom_call.1} parent=11 // pred_fallthru
          _
        // Predicated region
        $region33: #{tpu_custom_call.1} parent=11 // pred_check
          %p348 = pneg %p176
        $region34: #{tpu_custom_call.1} parent=11 // pred_check_branch
          %350 = sbr.rel (%p348) target = $region36
        $region35: #{tpu_custom_call.1} parent=11 // pred_region
          %s352 = ssub.s32 16, 16
          %353 = vsyncadd [#allocation9], %s352
          %s355 = sshll.u32 [#allocation10], 4
          %s356 = int_to_ptr.vmem [resolvable:$true] %s355
          %358 = dma.hbm_to_vmem [thread:$0]  %s6, 16, %s356, [#allocation9]
        $region36: #{tpu_custom_call.1} parent=11 // pred_fallthru
          _
        // Predicated region
        $region37: #{tpu_custom_call.1} parent=11 // pred_check
          %p359 = pneg %p197
        $region38: #{tpu_custom_call.1} parent=11 // pred_check_branch
          %361 = sbr.rel (%p359) target = $region40
        $region39: #{tpu_custom_call.1} parent=11 // pred_region
          _
        $region40: #{tpu_custom_call.1} parent=11 // pred_fallthru
          _
        // Predicated region
        $region41: #{tpu_custom_call.1} parent=11 // pred_check
          %p362 = pneg %p218
        $region42: #{tpu_custom_call.1} parent=11 // pred_check_branch
          %364 = sbr.rel (%p362) target = $region44
        $region43: #{tpu_custom_call.1} parent=11 // pred_region
          %s366 = ssub.s32 16, 16
          %367 = vsyncadd [#allocation12], %s366
          %s369 = sshll.u32 [#allocation11], 4
          %s370 = int_to_ptr.vmem [resolvable:$true] %s369
          %372 = dma.hbm_to_vmem [thread:$0]  %s8, 16, %s370, [#allocation12]
        $region44: #{tpu_custom_call.1} parent=11 // pred_fallthru
          _
        // Predicated region
        $region45: #{tpu_custom_call.1} parent=11 // pred_check
          %p373 = pneg %p239
        $region46: #{tpu_custom_call.1} parent=11 // pred_check_branch
          %375 = sbr.rel (%p373) target = $region48
        $region47: #{tpu_custom_call.1} parent=11 // pred_region
          _
        $region48: #{tpu_custom_call.1} parent=11 // pred_fallthru
          _
        // Predicated region
        $region49: #{tpu_custom_call.1} parent=11 // pred_check
          %p376 = pneg %p260
        $region50: #{tpu_custom_call.1} parent=11 // pred_check_branch
          %378 = sbr.rel (%p376) target = $region52
        $region51: #{tpu_custom_call.1} parent=11 // pred_region
          _
        $region52: #{tpu_custom_call.1} parent=11 // pred_fallthru
          _
      $region12: #{tpu_custom_call.1} parent=5 // pred_fallthru
        _
      %p379 = scmp.lt.s32.totalorder %s24, 2
      // Predicated region
      $region53: #{tpu_custom_call.1} parent=5 // pred_check
        %p380 = pneg %p379
      $region54: #{tpu_custom_call.1} parent=5 // pred_check_branch
        %382 = sbr.rel (%p380) target = $region56
      $region55: #{tpu_custom_call.1} parent=5 // pred_region
        // Predicated region
        $region57: #{tpu_custom_call.1} parent=55 // pred_check
          %p383 = pneg %p44
        $region58: #{tpu_custom_call.1} parent=55 // pred_check_branch
          %385 = sbr.rel (%p383) target = $region60
        $region59: #{tpu_custom_call.1} parent=55 // pred_region
          %p386 = scmp.lt.s32.totalorder %s24, 1
          %s387 = scalar_select %p386, %s24, 1
          %s388 = smul.addr %s387, 8
          %s389 = scalar_lea.vmem %s0, %s388
        $region60: #{tpu_custom_call.1} parent=55 // pred_fallthru
          _
      $region56: #{tpu_custom_call.1} parent=5 // pred_fallthru
        _
      %p390 = scmp.le.s32.totalorder 1, %s24
      %p391 = scmp.lt.s32.totalorder %s24, 3
      %p392 = pnand %p390, %p391
      %p393 = pneg %p392
      // Predicated region
      $region61: #{tpu_custom_call.1} parent=5 // pred_check
        _
      $region62: #{tpu_custom_call.1} parent=5 // pred_check_branch
        %395 = sbr.rel (%p392) target = $region64
      $region63: #{tpu_custom_call.1} parent=5 // pred_region
        %s396 = ssub.s32 %s24, 1
        // Predicated region
        $region65: #{tpu_custom_call.1} parent=63 // pred_check
          %p397 = pneg %p71
        $region66: #{tpu_custom_call.1} parent=63 // pred_check_branch
          %399 = sbr.rel (%p397) target = $region68
        $region67: #{tpu_custom_call.1} parent=63 // pred_region
          %400 = dma.done [#allocation3], 16
        $region68: #{tpu_custom_call.1} parent=63 // pred_fallthru
          _
        // Predicated region
        $region69: #{tpu_custom_call.1} parent=63 // pred_check
          %p401 = pneg %p92
        $region70: #{tpu_custom_call.1} parent=63 // pred_check_branch
          %403 = sbr.rel (%p401) target = $region72
        $region71: #{tpu_custom_call.1} parent=63 // pred_region
          %404 = dma.done [#allocation6], 16
        $region72: #{tpu_custom_call.1} parent=63 // pred_fallthru
          _
        // Predicated region
        $region73: #{tpu_custom_call.1} parent=63 // pred_check
          %p405 = pneg %p134
        $region74: #{tpu_custom_call.1} parent=63 // pred_check_branch
          %407 = sbr.rel (%p405) target = $region76
        $region75: #{tpu_custom_call.1} parent=63 // pred_region
          %408 = dma.done [#allocation6], 48
        $region76: #{tpu_custom_call.1} parent=63 // pred_fallthru
          _
        // Predicated region
        $region77: #{tpu_custom_call.1} parent=63 // pred_check
          %p409 = pneg %p155
        $region78: #{tpu_custom_call.1} parent=63 // pred_check_branch
          %411 = sbr.rel (%p409) target = $region80
        $region79: #{tpu_custom_call.1} parent=63 // pred_region
          %412 = dma.done [#allocation9], 16
        $region80: #{tpu_custom_call.1} parent=63 // pred_fallthru
          _
        // Predicated region
        $region81: #{tpu_custom_call.1} parent=63 // pred_check
          %p413 = pneg %p176
        $region82: #{tpu_custom_call.1} parent=63 // pred_check_branch
          %415 = sbr.rel (%p413) target = $region84
        $region83: #{tpu_custom_call.1} parent=63 // pred_region
          %416 = dma.done [#allocation9], 16
        $region84: #{tpu_custom_call.1} parent=63 // pred_fallthru
          _
        // Predicated region
        $region85: #{tpu_custom_call.1} parent=63 // pred_check
          %p417 = pneg %p218
        $region86: #{tpu_custom_call.1} parent=63 // pred_check_branch
          %419 = sbr.rel (%p417) target = $region88
        $region87: #{tpu_custom_call.1} parent=63 // pred_region
          %420 = dma.done [#allocation12], 16
        $region88: #{tpu_custom_call.1} parent=63 // pred_fallthru
          _
        %p421 = scmp.lt.s32.totalorder %s29, 1
        %s422 = scalar_select %p421, %s29, 1
        %s423 = smul.addr %s422, 8
        %s424 = scalar_lea.vmem %s0, %s423
        %p425 = pneg %p50
        %p426 = pneg %p47
        %p427 = pneg %p71
        %p428 = pneg %p68
        %p429 = pneg %p92
        %p430 = pneg %p89
        %p431 = pneg %p113
        %p432 = pneg %p110
        %p433 = pneg %p134
        %p434 = pneg %p131
        %p435 = pneg %p155
        %p436 = pneg %p152
        %p437 = pneg %p176
        %p438 = pneg %p173
        %p439 = pneg %p197
        %p440 = pneg %p194
        %p441 = pneg %p218
        %p442 = pneg %p215
        %p443 = pneg %p239
        %p444 = pneg %p236
        %p445 = pneg %p260
        %p446 = pneg %p257
        %p447 = pneg %p286
        %p448 = pneg %p283
        %s449 = sand.u32 %s273, 1
        %s450 = scalar_lea.sflag [#allocation4], %s449
        %s451 = sand.u32 %s273, 1
        %s452 = smul.addr %s451, 8
        %s453 = scalar_lea.vmem [#allocation13], %s452
        %p454 = scmp.lt.s32.totalorder %s29, 1
        %s455 = scalar_select %p454, %s29, 1
        %s456 = smul.addr %s455, 8
        %s457 = scalar_lea.vmem %s0, %s456
        %v459 = vld [vmem:[%s457] sm:$0xff]
        %v460 = vld [vmem:[#allocation2] sm:$0x1]
        %v461 = vld [vmem:[#allocation5] sm:$0x1]
        %vm462 = vcmask 261120
        %v463 = vsel %vm462, %v459, 0.0
        %464 = vadd.xlane.f32.xlu0 %v463
        %v465 = vpop.xlane.xlu0 %464
        %v466 = vrcp.pop 32.0
        %v467 = vmul.f32 %v465, %v466
        %v468 = vsub.f32 %v459, %v467
        %v469 = vmul.f32 %v468, %v468
        %v470 = vsel %vm462, %v469, 0.0
        %471 = vadd.xlane.f32.xlu0 %v470
        %v472 = vpop.xlane.xlu0 %471
        %v473 = vmul.f32 %v472, %v466
        %v474 = vadd.f32 %v473, 1e-05
        %v475 = vrsqrt.pop %v474
        %v476 = vmul.f32 %v468, %v475
        %v478 = vlaneseq
        %v479 = vshrl.u32 %v478, 7
        %v480 = vsub.s32 0, %v479
        %v481 = vrot.slane %v460, %v480
        %v483 = vmul.f32 %v476, %v481
        %v485 = vlaneseq
        %v486 = vshrl.u32 %v485, 7
        %v487 = vsub.s32 0, %v486
        %v488 = vrot.slane %v461, %v487
        %v490 = vadd.f32 %v483, %v488
        %v491 = vpack.c.bf16 %v490, %v490
        %v492 = vld [vmem:[%s3] sm:$0xff]
        %v493 = vld [vmem:[%s3 + $0x8] sm:$0xf]
        %v494 = vld [vmem:[%s3 + $0xc] sm:$0xff]
        %v495 = vld [vmem:[%s3 + $0x14] sm:$0xf]
        %v496 = vld [vmem:[%s3 + $0x18] sm:$0xff]
        %v497 = vld [vmem:[%s3 + $0x20] sm:$0xf]
        %v498 = vld [vmem:[%s3 + $0x24] sm:$0xff]
        %v499 = vld [vmem:[%s3 + $0x2c] sm:$0xf]
        %v500 = vld [vmem:[#allocation7] sm:$0x7]
        %v502 = vlaneseq
        %v503 = vshrl.u32 %v502, 7
        %v504 = vsub.s32 0, %v503
        %v505 = vrot.slane %v500, %v504
        %v506 = vlaneseq
        %v507 = vshrl.u32 %v506, 7
        %v508 = vsub.s32 1, %v507
        %v509 = vrot.slane %v500, %v508
        %v510 = vlaneseq
        %v511 = vshrl.u32 %v510, 7
        %v512 = vsub.s32 2, %v511
        %v513 = vrot.slane %v500, %v512
        %v525 = vunpack.c.l.b16 %v492
        %v526 = vunpack.c.h.b16 %v492
        %v527 = vunpack.c.l.b16 %v493
        %v528 = vunpack.c.l.b16 %v494
        %v529 = vunpack.c.h.b16 %v494
        %v530 = vunpack.c.l.b16 %v495
        %v531 = vunpack.c.l.b16 %v496
        %v532 = vunpack.c.h.b16 %v496
        %v533 = vunpack.c.l.b16 %v497
        %v534 = vunpack.c.l.b16 %v498
        %v535 = vunpack.c.h.b16 %v498
        %v536 = vunpack.c.l.b16 %v499
        %v537 = vpack.c.b16 %v528, %v525
        %v538 = vpack.c.b16 %v529, %v526
        %v539 = vpack.c.b16 %v530, %v527
        %v540 = vpack.c.b16 %v534, %v531
        %v541 = vpack.c.b16 %v535, %v532
        %v542 = vpack.c.b16 %v536, %v533
        %v550 = vsel %vm462, %v491, 0
        %552 = vmatprep.subr.bf16.mxu0 0
        %553 = vmatpush1.bf16.msra.mxu0 0
        %554 = vmatprep.subr.bf16.mxu0 0
        %555 = vmatpush1.bf16.msra.mxu0 0
        %556 = vmatprep.subr.bf16.mxu0 0
        %557 = vmatpush1.bf16.msra.mxu0 0
        %558 = vmatprep.subr.bf16.mxu0 0
        %559 = vmatpush1.bf16.msra.mxu0 0
        %560 = vmatprep.subr.bf16.mxu0 0
        %561 = vmatpush1.bf16.msra.mxu0 0
        %562 = vmatprep.subr.bf16.mxu0 0
        %563 = vmatpush1.bf16.msra.mxu0 0
        %564 = vmatprep.subr.bf16.mxu0 %v541
        %565 = vmatpush1.bf16.msra.mxu0 %v540
        %566 = vmatprep.subr.bf16.mxu0 %v538
        %567 = vmatpush1.bf16.msra.mxu0 %v537
        %568 = vmatprep.subr.bf16.mxu0 0
        %569 = vmatpush2.bf16.msra.mxu0 0
        %570 = vmatprep.subr.bf16.mxu0 0
        %571 = vmatpush2.bf16.msra.mxu0 0
        %572 = vmatprep.subr.bf16.mxu0 0
        %573 = vmatpush2.bf16.msra.mxu0 0
        %574 = vmatprep.subr.bf16.mxu0 0
        %575 = vmatpush2.bf16.msra.mxu0 0
        %576 = vmatprep.subr.bf16.mxu0 0
        %577 = vmatpush2.bf16.msra.mxu0 0
        %578 = vmatprep.subr.bf16.mxu0 0
        %579 = vmatpush2.bf16.msra.mxu0 0
        %580 = vmatprep.subr.bf16.mxu0 0
        %581 = vmatpush2.bf16.msra.mxu0 0
        %582 = vmatprep.subr.bf16.mxu0 0
        %583 = vmatpush2.bf16.msra.mxu0 0
        %584 = vmatprep.mubr.bf16.mxu0 0
        %585 = vmatmul.mubr.bf16.gmra.mxu0 %v550
        %v586 = vpop.f32.mrf.mxu0
        %v587 = vadd.f32 %v505, %v586
        %v588 = vpop.f32.mrf.mxu0
        %v589 = vadd.f32 %v509, %v588
        %v590 = vpop.f32.mrf.mxu0
        %v591 = vpop.f32.mrf.mxu0
        %592 = vdwg.mxu0
        %593 = vmatprep.subr.bf16.mxu0 0
        %594 = vmatpush1.bf16.msra.mxu0 0
        %595 = vmatprep.subr.bf16.mxu0 0
        %596 = vmatpush1.bf16.msra.mxu0 0
        %597 = vmatprep.subr.bf16.mxu0 0
        %598 = vmatpush1.bf16.msra.mxu0 0
        %599 = vmatprep.subr.bf16.mxu0 0
        %600 = vmatpush1.bf16.msra.mxu0 0
        %601 = vmatprep.subr.bf16.mxu0 0
        %602 = vmatpush1.bf16.msra.mxu0 0
        %603 = vmatprep.subr.bf16.mxu0 0
        %604 = vmatpush1.bf16.msra.mxu0 0
        %605 = vmatprep.subr.bf16.mxu0 0
        %606 = vmatpush1.bf16.msra.mxu0 %v542
        %607 = vmatprep.subr.bf16.mxu0 0
        %608 = vmatpush1.bf16.msra.mxu0 %v539
        %609 = vmatprep.subr.bf16.mxu0 0
        %610 = vmatpush2.bf16.msra.mxu0 0
        %611 = vmatprep.subr.bf16.mxu0 0
        %612 = vmatpush2.bf16.msra.mxu0 0
        %613 = vmatprep.subr.bf16.mxu0 0
        %614 = vmatpush2.bf16.msra.mxu0 0
        %615 = vmatprep.subr.bf16.mxu0 0
        %616 = vmatpush2.bf16.msra.mxu0 0
        %617 = vmatprep.subr.bf16.mxu0 0
        %618 = vmatpush2.bf16.msra.mxu0 0
        %619 = vmatprep.subr.bf16.mxu0 0
        %620 = vmatpush2.bf16.msra.mxu0 0
        %621 = vmatprep.subr.bf16.mxu0 0
        %622 = vmatpush2.bf16.msra.mxu0 0
        %623 = vmatprep.subr.bf16.mxu0 0
        %624 = vmatpush2.bf16.msra.mxu0 0
        %625 = vmatprep.mubr.bf16.mxu0 0
        %626 = vmatmul.mubr.bf16.gmra.mxu0 %v550
        %v627 = vpop.f32.mrf.mxu0
        %v628 = vadd.f32 %v513, %v627
        %v629 = vpop.f32.mrf.mxu0
        %v630 = vpop.f32.mrf.mxu0
        %v631 = vpop.f32.mrf.mxu0
        %632 = vdwg.mxu0
        %v633 = vpack.c.bf16 %v587, %v587
        %v634 = vpack.c.bf16 %v589, %v589
        %v635 = vpack.c.bf16 %v628, %v628
        %636 = vmatprep.subr.bf16.mxu0 0
        %637 = vmatpush1.bf16.xpose.msra.mxu0 0
        %638 = vmatprep.subr.bf16.mxu0 0
        %639 = vmatpush1.bf16.xpose.msra.mxu0 0
        %640 = vmatprep.subr.bf16.mxu0 0
        %641 = vmatpush1.bf16.xpose.msra.mxu0 0
        %642 = vmatprep.subr.bf16.mxu0 0
        %643 = vmatpush1.bf16.xpose.msra.mxu0 0
        %644 = vmatprep.subr.bf16.mxu0 0
        %645 = vmatpush1.bf16.xpose.msra.mxu0 0
        %646 = vmatprep.subr.bf16.mxu0 0
        %647 = vmatpush1.bf16.xpose.msra.mxu0 0
        %648 = vmatprep.subr.bf16.mxu0 0
        %649 = vmatpush1.bf16.xpose.msra.mxu0 0
        %650 = vmatprep.subr.bf16.mxu0 0
        %651 = vmatpush1.bf16.xpose.msra.mxu0 %v634
        %652 = vmatprep.subr.bf16.mxu0 0
        %653 = vmatpush2.bf16.xpose.msra.mxu0 0
        %654 = vmatprep.subr.bf16.mxu0 0
        %655 = vmatpush2.bf16.xpose.msra.mxu0 0
        %656 = vmatprep.subr.bf16.mxu0 0
        %657 = vmatpush2.bf16.xpose.msra.mxu0 0
        %658 = vmatprep.subr.bf16.mxu0 0
        %659 = vmatpush2.bf16.xpose.msra.mxu0 0
        %660 = vmatprep.subr.bf16.mxu0 0
        %661 = vmatpush2.bf16.xpose.msra.mxu0 0
        %662 = vmatprep.subr.bf16.mxu0 0
        %663 = vmatpush2.bf16.xpose.msra.mxu0 0
        %664 = vmatprep.subr.bf16.mxu0 0
        %665 = vmatpush2.bf16.xpose.msra.mxu0 0
        %666 = vmatprep.subr.bf16.mxu0 0
        %667 = vmatpush2.bf16.xpose.msra.mxu0 0
        %668 = vmatprep.mubr.bf16.mxu0 0
        %669 = vmatmul.mubr.bf16.gmra.mxu0 %v633
        %v670 = vpop.f32.mrf.mxu0
        %v671 = vadd.f32 0.0, %v670
        %v672 = vpop.f32.mrf.mxu0
        %v673 = vpop.f32.mrf.mxu0
        %v674 = vpop.f32.mrf.mxu0
        %675 = vdwg.mxu0
        %vm676 = vcmask 64512
        %v677 = vsel %vm676, %v671, -inf
        %678 = vmax.xlane.f32.xlu0 %v677
        %v679 = vpop.xlane.xlu0 %678
        %v680 = vsub.f32 %v671, %v679
        %v681 = vmul.f32 %v680, 1.442695
        %v682 = vpow.pop %v681
        %v683 = vsel %vm676, %v682, 0.0
        %684 = vadd.xlane.f32.xlu0 %v683
        %v685 = vpop.xlane.xlu0 %684
        %v686 = vrcp.pop %v685
        %v687 = vmul.f32 %v682, %v686
        %v688 = vpack.c.bf16 %v687, %v687
        %v690 = vsel %vm676, %v688, 0
        %vm692 = vcmask 1043456
        %v694 = vsel %vm692, %v635, 0
        %696 = vmatprep.subr.bf16.mxu0 0
        %697 = vmatpush1.bf16.msra.mxu0 0
        %698 = vmatprep.subr.bf16.mxu0 0
        %699 = vmatpush1.bf16.msra.mxu0 0
        %700 = vmatprep.subr.bf16.mxu0 0
        %701 = vmatpush1.bf16.msra.mxu0 0
        %702 = vmatprep.subr.bf16.mxu0 0
        %703 = vmatpush1.bf16.msra.mxu0 0
        %704 = vmatprep.subr.bf16.mxu0 0
        %705 = vmatpush1.bf16.msra.mxu0 0
        %706 = vmatprep.subr.bf16.mxu0 0
        %707 = vmatpush1.bf16.msra.mxu0 0
        %708 = vmatprep.subr.bf16.mxu0 0
        %709 = vmatpush1.bf16.msra.mxu0 0
        %710 = vmatprep.subr.bf16.mxu0 0
        %711 = vmatpush1.bf16.msra.mxu0 %v694
        %712 = vmatprep.subr.bf16.mxu0 0
        %713 = vmatpush2.bf16.msra.mxu0 0
        %714 = vmatprep.subr.bf16.mxu0 0
        %715 = vmatpush2.bf16.msra.mxu0 0
        %716 = vmatprep.subr.bf16.mxu0 0
        %717 = vmatpush2.bf16.msra.mxu0 0
        %718 = vmatprep.subr.bf16.mxu0 0
        %719 = vmatpush2.bf16.msra.mxu0 0
        %720 = vmatprep.subr.bf16.mxu0 0
        %721 = vmatpush2.bf16.msra.mxu0 0
        %722 = vmatprep.subr.bf16.mxu0 0
        %723 = vmatpush2.bf16.msra.mxu0 0
        %724 = vmatprep.subr.bf16.mxu0 0
        %725 = vmatpush2.bf16.msra.mxu0 0
        %726 = vmatprep.subr.bf16.mxu0 0
        %727 = vmatpush2.bf16.msra.mxu0 0
        %728 = vmatprep.mubr.bf16.mxu0 0
        %729 = vmatmul.mubr.bf16.gmra.mxu0 %v690
        %v730 = vpop.f32.mrf.mxu0
        %v731 = vadd.f32 0.0, %v730
        %v732 = vpop.f32.mrf.mxu0
        %v733 = vpop.f32.mrf.mxu0
        %v734 = vpop.f32.mrf.mxu0
        %735 = vdwg.mxu0
        %v736 = vadd.f32 %v459, %v731
        %v737 = vld [vmem:[#allocation8] sm:$0x1]
        %v738 = vld [vmem:[#allocation10] sm:$0x1]
        %v739 = vsel %vm462, %v736, 0.0
        %740 = vadd.xlane.f32.xlu0 %v739
        %v741 = vpop.xlane.xlu0 %740
        %v742 = vmul.f32 %v741, %v466
        %v743 = vsub.f32 %v736, %v742
        %v744 = vmul.f32 %v743, %v743
        %v745 = vsel %vm462, %v744, 0.0
        %746 = vadd.xlane.f32.xlu0 %v745
        %v747 = vpop.xlane.xlu0 %746
        %v748 = vmul.f32 %v747, %v466
        %v749 = vadd.f32 %v748, 1e-05
        %v750 = vrsqrt.pop %v749
        %v751 = vmul.f32 %v743, %v750
        %v753 = vlaneseq
        %v754 = vshrl.u32 %v753, 7
        %v755 = vsub.s32 0, %v754
        %v756 = vrot.slane %v737, %v755
        %v758 = vmul.f32 %v751, %v756
        %v760 = vlaneseq
        %v761 = vshrl.u32 %v760, 7
        %v762 = vsub.s32 0, %v761
        %v763 = vrot.slane %v738, %v762
        %v765 = vadd.f32 %v758, %v763
        %v766 = vpack.c.bf16 %v765, %v765
        %v767 = vld [vmem:[%s7] sm:$0xf]
        %v768 = vld [vmem:[%s7 + $0x4] sm:$0xf]
        %v769 = vld [vmem:[%s7 + $0x8] sm:$0xf]
        %v770 = vld [vmem:[%s7 + $0xc] sm:$0xf]
        %v771 = vld [vmem:[#allocation11] sm:$0x1]
        %v773 = vlaneseq
        %v774 = vshrl.u32 %v773, 7
        %v775 = vsub.s32 0, %v774
        %v776 = vrot.slane %v771, %v775
        %v782 = vunpack.c.l.b16 %v767
        %v783 = vunpack.c.l.b16 %v768
        %v784 = vunpack.c.l.b16 %v769
        %v785 = vunpack.c.l.b16 %v770
        %v786 = vpack.c.b16 %v783, %v782
        %v787 = vpack.c.b16 %v785, %v784
        %v791 = vsel %vm462, %v766, 0
        %793 = vmatprep.subr.bf16.mxu0 0
        %794 = vmatpush1.bf16.msra.mxu0 0
        %795 = vmatprep.subr.bf16.mxu0 0
        %796 = vmatpush1.bf16.msra.mxu0 0
        %797 = vmatprep.subr.bf16.mxu0 0
        %798 = vmatpush1.bf16.msra.mxu0 0
        %799 = vmatprep.subr.bf16.mxu0 0
        %800 = vmatpush1.bf16.msra.mxu0 0
        %801 = vmatprep.subr.bf16.mxu0 0
        %802 = vmatpush1.bf16.msra.mxu0 0
        %803 = vmatprep.subr.bf16.mxu0 0
        %804 = vmatpush1.bf16.msra.mxu0 0
        %805 = vmatprep.subr.bf16.mxu0 0
        %806 = vmatpush1.bf16.msra.mxu0 %v787
        %807 = vmatprep.subr.bf16.mxu0 0
        %808 = vmatpush1.bf16.msra.mxu0 %v786
        %809 = vmatprep.subr.bf16.mxu0 0
        %810 = vmatpush2.bf16.msra.mxu0 0
        %811 = vmatprep.subr.bf16.mxu0 0
        %812 = vmatpush2.bf16.msra.mxu0 0
        %813 = vmatprep.subr.bf16.mxu0 0
        %814 = vmatpush2.bf16.msra.mxu0 0
        %815 = vmatprep.subr.bf16.mxu0 0
        %816 = vmatpush2.bf16.msra.mxu0 0
        %817 = vmatprep.subr.bf16.mxu0 0
        %818 = vmatpush2.bf16.msra.mxu0 0
        %819 = vmatprep.subr.bf16.mxu0 0
        %820 = vmatpush2.bf16.msra.mxu0 0
        %821 = vmatprep.subr.bf16.mxu0 0
        %822 = vmatpush2.bf16.msra.mxu0 0
        %823 = vmatprep.subr.bf16.mxu0 0
        %824 = vmatpush2.bf16.msra.mxu0 0
        %825 = vmatprep.mubr.bf16.mxu0 0
        %826 = vmatmul.mubr.bf16.gmra.mxu0 %v791
        %v827 = vpop.f32.mrf.mxu0
        %v828 = vadd.f32 %v776, %v827
        %v829 = vpop.f32.mrf.mxu0
        %v830 = vpop.f32.mrf.mxu0
        %v831 = vpop.f32.mrf.mxu0
        %832 = vdwg.mxu0
        %v833 = vpack.c.bf16 %v828, %v828
        %v834 = vmax.bf16 %v833, 0
        %v835 = vld [vmem:[%s9] sm:$0xf]
        %v836 = vld [vmem:[%s9 + $0x4] sm:$0xf]
        %v837 = vld [vmem:[%s9 + $0x8] sm:$0xf]
        %v838 = vld [vmem:[%s9 + $0xc] sm:$0xf]
        %v839 = vld [vmem:[%s9 + $0x10] sm:$0xf]
        %v840 = vld [vmem:[%s9 + $0x14] sm:$0xf]
        %v841 = vld [vmem:[%s9 + $0x18] sm:$0xf]
        %v842 = vld [vmem:[%s9 + $0x1c] sm:$0xf]
        %v843 = vld [vmem:[%s9 + $0x20] sm:$0xf]
        %v844 = vld [vmem:[%s9 + $0x24] sm:$0xf]
        %v845 = vld [vmem:[%s9 + $0x28] sm:$0xf]
        %v846 = vld [vmem:[%s9 + $0x2c] sm:$0xf]
        %v847 = vld [vmem:[%s9 + $0x30] sm:$0xf]
        %v848 = vld [vmem:[%s9 + $0x34] sm:$0xf]
        %v849 = vld [vmem:[%s9 + $0x38] sm:$0xf]
        %v850 = vld [vmem:[%s9 + $0x3c] sm:$0xf]
        %v851 = vld [vmem:[%s10] sm:$0x1]
        %v853 = vlaneseq
        %v854 = vshrl.u32 %v853, 7
        %v855 = vsub.s32 0, %v854
        %v856 = vrot.slane %v851, %v855
        %v874 = vunpack.c.l.b16 %v835
        %v875 = vunpack.c.l.b16 %v836
        %v876 = vunpack.c.l.b16 %v837
        %v877 = vunpack.c.l.b16 %v838
        %v878 = vunpack.c.l.b16 %v839
        %v879 = vunpack.c.l.b16 %v840
        %v880 = vunpack.c.l.b16 %v841
        %v881 = vunpack.c.l.b16 %v842
        %v882 = vunpack.c.l.b16 %v843
        %v883 = vunpack.c.l.b16 %v844
        %v884 = vunpack.c.l.b16 %v845
        %v885 = vunpack.c.l.b16 %v846
        %v886 = vunpack.c.l.b16 %v847
        %v887 = vunpack.c.l.b16 %v848
        %v888 = vunpack.c.l.b16 %v849
        %v889 = vunpack.c.l.b16 %v850
        %v890 = vpack.c.b16 %v875, %v874
        %v891 = vpack.c.b16 %v877, %v876
        %v892 = vpack.c.b16 %v879, %v878
        %v893 = vpack.c.b16 %v881, %v880
        %v894 = vpack.c.b16 %v883, %v882
        %v895 = vpack.c.b16 %v885, %v884
        %v896 = vpack.c.b16 %v887, %v886
        %v897 = vpack.c.b16 %v889, %v888
        %906 = vmatprep.subr.bf16.mxu0 0
        %907 = vmatpush1.bf16.msra.mxu0 %v897
        %908 = vmatprep.subr.bf16.mxu0 0
        %909 = vmatpush1.bf16.msra.mxu0 %v896
        %910 = vmatprep.subr.bf16.mxu0 0
        %911 = vmatpush1.bf16.msra.mxu0 %v895
        %912 = vmatprep.subr.bf16.mxu0 0
        %913 = vmatpush1.bf16.msra.mxu0 %v894
        %914 = vmatprep.subr.bf16.mxu0 0
        %915 = vmatpush1.bf16.msra.mxu0 %v893
        %916 = vmatprep.subr.bf16.mxu0 0
        %917 = vmatpush1.bf16.msra.mxu0 %v892
        %918 = vmatprep.subr.bf16.mxu0 0
        %919 = vmatpush1.bf16.msra.mxu0 %v891
        %920 = vmatprep.subr.bf16.mxu0 0
        %921 = vmatpush1.bf16.msra.mxu0 %v890
        %922 = vmatprep.subr.bf16.mxu0 0
        %923 = vmatpush2.bf16.msra.mxu0 0
        %924 = vmatprep.subr.bf16.mxu0 0
        %925 = vmatpush2.bf16.msra.mxu0 0
        %926 = vmatprep.subr.bf16.mxu0 0
        %927 = vmatpush2.bf16.msra.mxu0 0
        %928 = vmatprep.subr.bf16.mxu0 0
        %929 = vmatpush2.bf16.msra.mxu0 0
        %930 = vmatprep.subr.bf16.mxu0 0
        %931 = vmatpush2.bf16.msra.mxu0 0
        %932 = vmatprep.subr.bf16.mxu0 0
        %933 = vmatpush2.bf16.msra.mxu0 0
        %934 = vmatprep.subr.bf16.mxu0 0
        %935 = vmatpush2.bf16.msra.mxu0 0
        %936 = vmatprep.subr.bf16.mxu0 0
        %937 = vmatpush2.bf16.msra.mxu0 0
        %938 = vmatprep.mubr.bf16.mxu0 0
        %939 = vmatmul.mubr.bf16.gmra.mxu0 %v834
        %v940 = vpop.f32.mrf.mxu0
        %v941 = vadd.f32 %v856, %v940
        %v942 = vpop.f32.mrf.mxu0
        %v943 = vpop.f32.mrf.mxu0
        %v944 = vpop.f32.mrf.mxu0
        %945 = vdwg.mxu0
        %v946 = vadd.f32 %v736, %v941
        %947 = vst.msk [vmem:[%s453] sm:$0xff] %vm462, %v946
        %s948 = sand.u32 %s273, 1
        %s949 = scalar_lea.sflag [#allocation4], %s948
        %s950 = sand.u32 %s273, 1
        %s951 = smul.addr %s950, 8
        %s952 = scalar_lea.vmem [#allocation13], %s951
        // Predicated region
        $region89: #{tpu_custom_call.1} parent=63 // pred_check
          %p953 = pneg %p283
        $region90: #{tpu_custom_call.1} parent=63 // pred_check_branch
          %955 = sbr.rel (%p953) target = $region92
        $region91: #{tpu_custom_call.1} parent=63 // pred_region
          %s957 = ssub.s32 128, 128
          %958 = vsyncadd %s949, %s957
          %s959 = smul.addr %s29, 128
          %s960 = scalar_lea.hbm %s11, %s959
          %s962 = sshll.u32 %s952, 4
          %s963 = int_to_ptr.vmem [resolvable:$true] %s962
          %965 = dma.vmem_to_hbm [thread:$0]  %s963, 128, %s960, %s949
        $region92: #{tpu_custom_call.1} parent=63 // pred_fallthru
          _
      $region64: #{tpu_custom_call.1} parent=5 // pred_fallthru
        _
      %p966 = scmp.le.s32.totalorder 2, %s24
      // Predicated region
      $region93: #{tpu_custom_call.1} parent=5 // pred_check
        %p967 = pneg %p966
      $region94: #{tpu_custom_call.1} parent=5 // pred_check_branch
        %969 = sbr.rel (%p967) target = $region96
      $region95: #{tpu_custom_call.1} parent=5 // pred_region
        %s970 = ssub.s32 %s24, 2
        // Predicated region
        $region97: #{tpu_custom_call.1} parent=95 // pred_check
          %p971 = pneg %p289
        $region98: #{tpu_custom_call.1} parent=95 // pred_check_branch
          %973 = sbr.rel (%p971) target = $region100
        $region99: #{tpu_custom_call.1} parent=95 // pred_region
          %s974 = sand.u32 %s274, 1
          %s975 = scalar_lea.sflag [#allocation4], %s974
          %s976 = sand.u32 %s274, 1
          %s977 = smul.addr %s976, 8
          %s978 = scalar_lea.vmem [#allocation13], %s977
          %979 = dma.done %s975, 128
        $region100: #{tpu_custom_call.1} parent=95 // pred_fallthru
          _
      $region96: #{tpu_custom_call.1} parent=5 // pred_fallthru
        _
    $region6: #{tpu_custom_call.1} parent=1 // loop_footer
      %s28 = sadd.s32 1, %s24
    $region7: #{tpu_custom_call.1} parent=1 // loop_footer_branch
      %23 = sbr.rel target = $region3
    $region8: #{tpu_custom_call.1} parent=1 // loop_exit
      _
    %980 = vsyncpa [#allocation3], 1
    %s981 = scalar_lea.sflag [#allocation3], 1
    %982 = vsyncpa %s981, 1
    %983 = vsyncpa [#allocation6], 1
    %984 = vsyncpa [#allocation9], 1
    %985 = vsyncpa [#allocation12], 1
    %986 = vsyncpa [#allocation4], 1
    %s987 = scalar_lea.sflag [#allocation4], 1
    %988 = vsyncpa %s987, 1

</llo_original>
